<compile_context>
chip_gen: v7x
topology: tpu7x:2x2x1
jax: 0.10.0
libtpu: 0.0.40
codegen_flags: <defaults>
</compile_context>

<pallas_src>
import functools

import jax
import jax.numpy as jnp
from jax import lax
from jax.experimental import pallas as pl
from jax.experimental.pallas import tpu as pltpu

K = 7
PAD = K // 2


def spatial_attention_kernel(w_ref, x_ref, o_ref, *, H, W):
    # w_ref : SMEM (2*K*K,) f32 conv weights, laid out [in_channel, kh, kw]
    # x_ref : VMEM (Nb, C, H*W)  lane-dense input block
    # o_ref : VMEM (Nb, C, H*W)  lane-dense output block
    HW = H * W
    off = PAD * W + PAD                  # flat index of map[0, 0] in padded map
    # padded flat map length L = off + HW + off = (H + 2*PAD)*W + 2*PAD

    xf = x_ref[...].astype(jnp.float32)              # (Nb, C, HW)
    nb = xf.shape[0]

    # Channel-wise mean / max (C is the sublane dim -> cheap reduction).
    avg = jnp.mean(xf, axis=1)                       # (Nb, HW)
    mx = jnp.max(xf, axis=1)                         # (Nb, HW)

    # Zero-padded flattened maps:
    #   [PAD guard | PAD zero rows | H*W real map | PAD zero rows | PAD guard]
    # The zero border reproduces PyTorch's zero padding of the concatenated
    # [avg, max] tensor (vertical pad = zero rows; the guards absorb the
    # horizontal taps at the extreme corners, which are masked anyway).
    zpad = jnp.zeros((nb, off), jnp.float32)
    avg_p = jnp.concatenate([zpad, avg, zpad], axis=1)   # (Nb, L)
    max_p = jnp.concatenate([zpad, mx, zpad], axis=1)    # (Nb, L)

    # Column index of every flattened output pixel (for row-wrap masking).
    col = lax.broadcasted_iota(jnp.int32, (nb, HW), dimension=1) % W

    # 7x7 conv, fully unrolled taps.  slab(kh, kw) = padded[:, kh*W + kw :
    # kh*W + kw + HW] aligns source pixel (h + kh - PAD, w + kw - PAD) with
    # output pixel (h, w).  Vertically out-of-range taps land on the zero
    # border rows; horizontally out-of-range taps (row wrap-around in the
    # flat layout) are zeroed by one mask per non-center kw.
    acc = jnp.zeros((nb, HW), jnp.float32)
    for kw in range(K):
        dw = kw - PAD
        tap = jnp.zeros((nb, HW), jnp.float32)
        for kh in range(K):
            s = kh * W + kw
            wa = w_ref[0 * K * K + kh * K + kw]      # scalar from SMEM
            wm = w_ref[1 * K * K + kh * K + kw]
            tap = tap + wa * avg_p[:, s:s + HW]
            tap = tap + wm * max_p[:, s:s + HW]
        if dw != 0:
            valid = jnp.logical_and(col + dw >= 0, col + dw < W)
            tap = jnp.where(valid, tap, 0.0)
        acc = acc + tap

    att = jax.nn.sigmoid(acc)                        # (Nb, HW)
    o_ref[...] = (xf * att[:, None, :]).astype(o_ref.dtype)


def _choose_block_n(N, C, HW, itemsize):
    """Images per grid step: target ~256 KiB input blocks, keep >=2 grid
    steps (megacore / v7x dual TensorCore), stay a divisor of N, and keep the
    in-kernel vreg working set modest (cap 32)."""
    bytes_per_img = max(1, C * HW * itemsize)
    nb = max(1, (256 * 1024) // bytes_per_img)
    nb = min(nb, 32)
    if N >= 2:
        nb = min(nb, N // 2)
    nb = max(1, min(nb, N))
    while N % nb:
        nb -= 1
    return int(nb)


def test_forward(x, conv_w):
    """x: (N, C, H, W); conv_w: (1, 2, K, K) = Conv2d(2, 1, 7, pad=3, bias=False)."""
    N, C, H, W = x.shape
    HW = H * W

    x_flat = x.reshape(N, C, HW)                     # contiguous -> free reshape
    w_flat = conv_w.reshape(-1).astype(jnp.float32)  # (2*K*K,)

    nb = _choose_block_n(N, C, HW, x.dtype.itemsize)
    grid = (N // nb,)

    out_flat = pl.pallas_call(
        functools.partial(spatial_attention_kernel, H=H, W=W),
        out_shape=jax.ShapeDtypeStruct((N, C, HW), x.dtype),
        grid_spec=pltpu.PrefetchScalarGridSpec(
            num_scalar_prefetch=0,
            grid=grid,
            in_specs=[
                pl.BlockSpec(memory_space=pltpu.MemorySpace.SMEM),   # weights
                pl.BlockSpec((nb, C, HW), lambda n: (n, 0, 0)),      # x
            ],
            out_specs=pl.BlockSpec((nb, C, HW), lambda n: (n, 0, 0)),
        ),
        compiler_params=pltpu.CompilerParams(
            dimension_semantics=("parallel",)),
    )(w_flat, x_flat)
    return out_flat.reshape(N, C, H, W)


def ref_forward(x, conv_w):
    """Pure-JAX reference mirroring the PyTorch module."""
    avg = jnp.mean(x, axis=1, keepdims=True)
    mx = jnp.max(x, axis=1, keepdims=True)
    cat = jnp.concatenate([avg, mx], axis=1)                 # (N, 2, H, W)
    conv = lax.conv_general_dilated(
        cat, conv_w, window_strides=(1, 1),
        padding=((PAD, PAD), (PAD, PAD)),
        dimension_numbers=("NCHW", "OIHW", "NCHW"),
        precision=lax.Precision.HIGHEST)
    return x * jax.nn.sigmoid(conv)


if __name__ == "__main__":
    key = jax.random.PRNGKey(0)
    k_x, k_w = jax.random.split(key)

    N, C, H, W = 2, 4, 16, 16
    x = jax.random.normal(k_x, (N, C, H, W), dtype=jnp.float32)
    # Deterministic synthetic Conv2d(2, 1, 7, padding=3, bias=False) weight.
    conv_w = 0.1 * jax.random.normal(k_w, (1, 2, K, K), dtype=jnp.float32)

    out = jax.block_until_ready(test_forward(x, conv_w))
    ref = jax.block_until_ready(ref_forward(x, conv_w))

    assert out.shape == (N, C, H, W)
    assert jnp.allclose(out, ref, atol=1e-3, rtol=1e-3), (
        f"max abs err {jnp.max(jnp.abs(out - ref))}")

    print("KERNEL_OK")
</pallas_src>

<mosaic_0001>
module attributes {stable_mosaic.version = 11 : i64} {
  func.func @spatial_attention_kernel(%arg0: i32, %arg1: memref<98xf32, #tpu.memory_space<smem>>, %arg2: memref<1x4x256xf32, #tpu.memory_space<vmem>>, %arg3: memref<1x4x256xf32, #tpu.memory_space<vmem>>) attributes {dimension_semantics = [#tpu.dimension_semantics<parallel>], iteration_bounds = array<i64: 2>, scalar_prefetch = 0 : i64, scratch_operands = 0 : i64, tpu.core_type = #tpu.core_type<tc>, window_params = [{transform_indices = @transform_0, window_bounds = array<i64: 98>}, {transform_indices = @transform_1, window_bounds = array<i64: 1, 4, 256>}, {transform_indices = @transform_2, window_bounds = array<i64: 1, 4, 256>}]} {
    %c0 = arith.constant 0 : index
    %c0_0 = arith.constant 0 : index
    %c0_1 = arith.constant 0 : index
    %0 = vector.load %arg2[%c0, %c0_0, %c0_1] : memref<1x4x256xf32, #tpu.memory_space<vmem>>, vector<1x4x256xf32>
    %cst = arith.constant dense<0.000000e+00> : vector<1x256xf32>
    %1 = vector.multi_reduction <add>, %0, %cst [1] : vector<1x4x256xf32> to vector<1x256xf32>
    %cst_2 = arith.constant 4.000000e+00 : f32
    %2 = vector.broadcast %cst_2 : f32 to vector<1x256xf32>
    %3 = arith.divf %1, %2 : vector<1x256xf32>
    %cst_3 = arith.constant dense<0xFF800000> : vector<1x256xf32>
    %4 = vector.multi_reduction <maximumf>, %0, %cst_3 [1] : vector<1x4x256xf32> to vector<1x256xf32>
    %cst_4 = arith.constant 0.000000e+00 : f32
    %5 = vector.broadcast %cst_4 : f32 to vector<1x51xf32>
    %6 = tpu.concatenate %5, %3, %5 in 1 : vector<1x51xf32>, vector<1x256xf32>, vector<1x51xf32> -> vector<1x358xf32>
    %7 = tpu.concatenate %5, %4, %5 in 1 : vector<1x51xf32>, vector<1x256xf32>, vector<1x51xf32> -> vector<1x358xf32>
    %8 = tpu.iota {dimensions = array<i32: 1>} : vector<1x256xi32>
    %c16_i32 = arith.constant 16 : i32
    %c0_i32 = arith.constant 0 : i32
    %9 = arith.cmpi eq, %c16_i32, %c0_i32 : i32
    %c1_i32 = arith.constant 1 : i32
    %10 = arith.select %9, %c1_i32, %c16_i32 : i32
    %11 = vector.broadcast %10 : i32 to vector<1x256xi32>
    %12 = arith.remsi %8, %11 : vector<1x256xi32>
    %c0_i32_5 = arith.constant 0 : i32
    %13 = vector.broadcast %c0_i32_5 : i32 to vector<1x256xi32>
    %14 = arith.cmpi ne, %12, %13 : vector<1x256xi32>
    %c0_i32_6 = arith.constant 0 : i32
    %15 = vector.broadcast %c0_i32_6 : i32 to vector<1x256xi32>
    %16 = arith.cmpi slt, %12, %15 : vector<1x256xi32>
    %c0_i32_7 = arith.constant 0 : i32
    %17 = arith.cmpi slt, %10, %c0_i32_7 : i32
    %18 = vector.broadcast %17 : i1 to vector<1x256xi1>
    %19 = vector.broadcast %18 : vector<1x256xi1> to vector<1x256xi1>
    %20 = arith.xori %16, %19 : vector<1x256xi1>
    %21 = arith.andi %20, %14 : vector<1x256xi1>
    %22 = vector.broadcast %10 : i32 to vector<1x256xi32>
    %23 = arith.addi %12, %22 : vector<1x256xi32>
    %24 = arith.select %21, %23, %12 : vector<1x256xi1>, vector<1x256xi32>
    %cst_8 = arith.constant 0.000000e+00 : f32
    %25 = vector.broadcast %cst_8 : f32 to vector<1x256xf32>
    %cst_9 = arith.constant 0.000000e+00 : f32
    %26 = vector.broadcast %cst_9 : f32 to vector<1x256xf32>
    %c0_10 = arith.constant 0 : index
    %27 = memref.load %arg1[%c0_10] : memref<98xf32, #tpu.memory_space<smem>>
    %c49 = arith.constant 49 : index
    %28 = memref.load %arg1[%c49] : memref<98xf32, #tpu.memory_space<smem>>
    %29 = vector.extract_strided_slice %6 {offsets = [0, 0], sizes = [1, 256], strides = [1, 1]} : vector<1x358xf32> to vector<1x256xf32>
    %30 = vector.broadcast %27 : f32 to vector<1x256xf32>
    %31 = arith.mulf %30, %29 : vector<1x256xf32>
    %32 = arith.addf %26, %31 : vector<1x256xf32>
    %33 = vector.extract_strided_slice %7 {offsets = [0, 0], sizes = [1, 256], strides = [1, 1]} : vector<1x358xf32> to vector<1x256xf32>
    %34 = vector.broadcast %28 : f32 to vector<1x256xf32>
    %35 = arith.mulf %34, %33 : vector<1x256xf32>
    %36 = arith.addf %32, %35 : vector<1x256xf32>
    %c7 = arith.constant 7 : index
    %37 = memref.load %arg1[%c7] : memref<98xf32, #tpu.memory_space<smem>>
    %c56 = arith.constant 56 : index
    %38 = memref.load %arg1[%c56] : memref<98xf32, #tpu.memory_space<smem>>
    %39 = vector.extract_strided_slice %6 {offsets = [0, 16], sizes = [1, 256], strides = [1, 1]} : vector<1x358xf32> to vector<1x256xf32>
    %40 = vector.broadcast %37 : f32 to vector<1x256xf32>
    %41 = arith.mulf %40, %39 : vector<1x256xf32>
    %42 = arith.addf %36, %41 : vector<1x256xf32>
    %43 = vector.extract_strided_slice %7 {offsets = [0, 16], sizes = [1, 256], strides = [1, 1]} : vector<1x358xf32> to vector<1x256xf32>
    %44 = vector.broadcast %38 : f32 to vector<1x256xf32>
    %45 = arith.mulf %44, %43 : vector<1x256xf32>
    %46 = arith.addf %42, %45 : vector<1x256xf32>
    %c14 = arith.constant 14 : index
    %47 = memref.load %arg1[%c14] : memref<98xf32, #tpu.memory_space<smem>>
    %c63 = arith.constant 63 : index
    %48 = memref.load %arg1[%c63] : memref<98xf32, #tpu.memory_space<smem>>
    %49 = vector.extract_strided_slice %6 {offsets = [0, 32], sizes = [1, 256], strides = [1, 1]} : vector<1x358xf32> to vector<1x256xf32>
    %50 = vector.broadcast %47 : f32 to vector<1x256xf32>
    %51 = arith.mulf %50, %49 : vector<1x256xf32>
    %52 = arith.addf %46, %51 : vector<1x256xf32>
    %53 = vector.extract_strided_slice %7 {offsets = [0, 32], sizes = [1, 256], strides = [1, 1]} : vector<1x358xf32> to vector<1x256xf32>
    %54 = vector.broadcast %48 : f32 to vector<1x256xf32>
    %55 = arith.mulf %54, %53 : vector<1x256xf32>
    %56 = arith.addf %52, %55 : vector<1x256xf32>
    %c21 = arith.constant 21 : index
    %57 = memref.load %arg1[%c21] : memref<98xf32, #tpu.memory_space<smem>>
    %c70 = arith.constant 70 : index
    %58 = memref.load %arg1[%c70] : memref<98xf32, #tpu.memory_space<smem>>
    %59 = vector.extract_strided_slice %6 {offsets = [0, 48], sizes = [1, 256], strides = [1, 1]} : vector<1x358xf32> to vector<1x256xf32>
    %60 = vector.broadcast %57 : f32 to vector<1x256xf32>
    %61 = arith.mulf %60, %59 : vector<1x256xf32>
    %62 = arith.addf %56, %61 : vector<1x256xf32>
    %63 = vector.extract_strided_slice %7 {offsets = [0, 48], sizes = [1, 256], strides = [1, 1]} : vector<1x358xf32> to vector<1x256xf32>
    %64 = vector.broadcast %58 : f32 to vector<1x256xf32>
    %65 = arith.mulf %64, %63 : vector<1x256xf32>
    %66 = arith.addf %62, %65 : vector<1x256xf32>
    %c28 = arith.constant 28 : index
    %67 = memref.load %arg1[%c28] : memref<98xf32, #tpu.memory_space<smem>>
    %c77 = arith.constant 77 : index
    %68 = memref.load %arg1[%c77] : memref<98xf32, #tpu.memory_space<smem>>
    %69 = vector.extract_strided_slice %6 {offsets = [0, 64], sizes = [1, 256], strides = [1, 1]} : vector<1x358xf32> to vector<1x256xf32>
    %70 = vector.broadcast %67 : f32 to vector<1x256xf32>
    %71 = arith.mulf %70, %69 : vector<1x256xf32>
    %72 = arith.addf %66, %71 : vector<1x256xf32>
    %73 = vector.extract_strided_slice %7 {offsets = [0, 64], sizes = [1, 256], strides = [1, 1]} : vector<1x358xf32> to vector<1x256xf32>
    %74 = vector.broadcast %68 : f32 to vector<1x256xf32>
    %75 = arith.mulf %74, %73 : vector<1x256xf32>
    %76 = arith.addf %72, %75 : vector<1x256xf32>
    %c35 = arith.constant 35 : index
    %77 = memref.load %arg1[%c35] : memref<98xf32, #tpu.memory_space<smem>>
    %c84 = arith.constant 84 : index
    %78 = memref.load %arg1[%c84] : memref<98xf32, #tpu.memory_space<smem>>
    %79 = vector.extract_strided_slice %6 {offsets = [0, 80], sizes = [1, 256], strides = [1, 1]} : vector<1x358xf32> to vector<1x256xf32>
    %80 = vector.broadcast %77 : f32 to vector<1x256xf32>
    %81 = arith.mulf %80, %79 : vector<1x256xf32>
    %82 = arith.addf %76, %81 : vector<1x256xf32>
    %83 = vector.extract_strided_slice %7 {offsets = [0, 80], sizes = [1, 256], strides = [1, 1]} : vector<1x358xf32> to vector<1x256xf32>
    %84 = vector.broadcast %78 : f32 to vector<1x256xf32>
    %85 = arith.mulf %84, %83 : vector<1x256xf32>
    %86 = arith.addf %82, %85 : vector<1x256xf32>
    %c42 = arith.constant 42 : index
    %87 = memref.load %arg1[%c42] : memref<98xf32, #tpu.memory_space<smem>>
    %c91 = arith.constant 91 : index
    %88 = memref.load %arg1[%c91] : memref<98xf32, #tpu.memory_space<smem>>
    %89 = vector.extract_strided_slice %6 {offsets = [0, 96], sizes = [1, 256], strides = [1, 1]} : vector<1x358xf32> to vector<1x256xf32>
    %90 = vector.broadcast %87 : f32 to vector<1x256xf32>
    %91 = arith.mulf %90, %89 : vector<1x256xf32>
    %92 = arith.addf %86, %91 : vector<1x256xf32>
    %93 = vector.extract_strided_slice %7 {offsets = [0, 96], sizes = [1, 256], strides = [1, 1]} : vector<1x358xf32> to vector<1x256xf32>
    %94 = vector.broadcast %88 : f32 to vector<1x256xf32>
    %95 = arith.mulf %94, %93 : vector<1x256xf32>
    %96 = arith.addf %92, %95 : vector<1x256xf32>
    %c-3_i32 = arith.constant -3 : i32
    %97 = vector.broadcast %c-3_i32 : i32 to vector<1x256xi32>
    %98 = arith.addi %24, %97 : vector<1x256xi32>
    %c0_i32_11 = arith.constant 0 : i32
    %99 = vector.broadcast %c0_i32_11 : i32 to vector<1x256xi32>
    %100 = arith.cmpi sge, %98, %99 : vector<1x256xi32>
    %c-3_i32_12 = arith.constant -3 : i32
    %101 = vector.broadcast %c-3_i32_12 : i32 to vector<1x256xi32>
    %102 = arith.addi %24, %101 : vector<1x256xi32>
    %c16_i32_13 = arith.constant 16 : i32
    %103 = vector.broadcast %c16_i32_13 : i32 to vector<1x256xi32>
    %104 = arith.cmpi slt, %102, %103 : vector<1x256xi32>
    %105 = arith.andi %100, %104 : vector<1x256xi1>
    %cst_14 = arith.constant 0.000000e+00 : f32
    %106 = vector.broadcast %cst_14 : f32 to vector<1x256xf32>
    %107 = arith.select %105, %96, %106 : vector<1x256xi1>, vector<1x256xf32>
    %108 = arith.addf %25, %107 : vector<1x256xf32>
    %cst_15 = arith.constant 0.000000e+00 : f32
    %109 = vector.broadcast %cst_15 : f32 to vector<1x256xf32>
    %c1 = arith.constant 1 : index
    %110 = memref.load %arg1[%c1] : memref<98xf32, #tpu.memory_space<smem>>
    %c50 = arith.constant 50 : index
    %111 = memref.load %arg1[%c50] : memref<98xf32, #tpu.memory_space<smem>>
    %112 = vector.extract_strided_slice %6 {offsets = [0, 1], sizes = [1, 256], strides = [1, 1]} : vector<1x358xf32> to vector<1x256xf32>
    %113 = vector.broadcast %110 : f32 to vector<1x256xf32>
    %114 = arith.mulf %113, %112 : vector<1x256xf32>
    %115 = arith.addf %109, %114 : vector<1x256xf32>
    %116 = vector.extract_strided_slice %7 {offsets = [0, 1], sizes = [1, 256], strides = [1, 1]} : vector<1x358xf32> to vector<1x256xf32>
    %117 = vector.broadcast %111 : f32 to vector<1x256xf32>
    %118 = arith.mulf %117, %116 : vector<1x256xf32>
    %119 = arith.addf %115, %118 : vector<1x256xf32>
    %c8 = arith.constant 8 : index
    %120 = memref.load %arg1[%c8] : memref<98xf32, #tpu.memory_space<smem>>
    %c57 = arith.constant 57 : index
    %121 = memref.load %arg1[%c57] : memref<98xf32, #tpu.memory_space<smem>>
    %122 = vector.extract_strided_slice %6 {offsets = [0, 17], sizes = [1, 256], strides = [1, 1]} : vector<1x358xf32> to vector<1x256xf32>
    %123 = vector.broadcast %120 : f32 to vector<1x256xf32>
    %124 = arith.mulf %123, %122 : vector<1x256xf32>
    %125 = arith.addf %119, %124 : vector<1x256xf32>
    %126 = vector.extract_strided_slice %7 {offsets = [0, 17], sizes = [1, 256], strides = [1, 1]} : vector<1x358xf32> to vector<1x256xf32>
    %127 = vector.broadcast %121 : f32 to vector<1x256xf32>
    %128 = arith.mulf %127, %126 : vector<1x256xf32>
    %129 = arith.addf %125, %128 : vector<1x256xf32>
    %c15 = arith.constant 15 : index
    %130 = memref.load %arg1[%c15] : memref<98xf32, #tpu.memory_space<smem>>
    %c64 = arith.constant 64 : index
    %131 = memref.load %arg1[%c64] : memref<98xf32, #tpu.memory_space<smem>>
    %132 = vector.extract_strided_slice %6 {offsets = [0, 33], sizes = [1, 256], strides = [1, 1]} : vector<1x358xf32> to vector<1x256xf32>
    %133 = vector.broadcast %130 : f32 to vector<1x256xf32>
    %134 = arith.mulf %133, %132 : vector<1x256xf32>
    %135 = arith.addf %129, %134 : vector<1x256xf32>
    %136 = vector.extract_strided_slice %7 {offsets = [0, 33], sizes = [1, 256], strides = [1, 1]} : vector<1x358xf32> to vector<1x256xf32>
    %137 = vector.broadcast %131 : f32 to vector<1x256xf32>
    %138 = arith.mulf %137, %136 : vector<1x256xf32>
    %139 = arith.addf %135, %138 : vector<1x256xf32>
    %c22 = arith.constant 22 : index
    %140 = memref.load %arg1[%c22] : memref<98xf32, #tpu.memory_space<smem>>
    %c71 = arith.constant 71 : index
    %141 = memref.load %arg1[%c71] : memref<98xf32, #tpu.memory_space<smem>>
    %142 = vector.extract_strided_slice %6 {offsets = [0, 49], sizes = [1, 256], strides = [1, 1]} : vector<1x358xf32> to vector<1x256xf32>
    %143 = vector.broadcast %140 : f32 to vector<1x256xf32>
    %144 = arith.mulf %143, %142 : vector<1x256xf32>
    %145 = arith.addf %139, %144 : vector<1x256xf32>
    %146 = vector.extract_strided_slice %7 {offsets = [0, 49], sizes = [1, 256], strides = [1, 1]} : vector<1x358xf32> to vector<1x256xf32>
    %147 = vector.broadcast %141 : f32 to vector<1x256xf32>
    %148 = arith.mulf %147, %146 : vector<1x256xf32>
    %149 = arith.addf %145, %148 : vector<1x256xf32>
    %c29 = arith.constant 29 : index
    %150 = memref.load %arg1[%c29] : memref<98xf32, #tpu.memory_space<smem>>
    %c78 = arith.constant 78 : index
    %151 = memref.load %arg1[%c78] : memref<98xf32, #tpu.memory_space<smem>>
    %152 = vector.extract_strided_slice %6 {offsets = [0, 65], sizes = [1, 256], strides = [1, 1]} : vector<1x358xf32> to vector<1x256xf32>
    %153 = vector.broadcast %150 : f32 to vector<1x256xf32>
    %154 = arith.mulf %153, %152 : vector<1x256xf32>
    %155 = arith.addf %149, %154 : vector<1x256xf32>
    %156 = vector.extract_strided_slice %7 {offsets = [0, 65], sizes = [1, 256], strides = [1, 1]} : vector<1x358xf32> to vector<1x256xf32>
    %157 = vector.broadcast %151 : f32 to vector<1x256xf32>
    %158 = arith.mulf %157, %156 : vector<1x256xf32>
    %159 = arith.addf %155, %158 : vector<1x256xf32>
    %c36 = arith.constant 36 : index
    %160 = memref.load %arg1[%c36] : memref<98xf32, #tpu.memory_space<smem>>
    %c85 = arith.constant 85 : index
    %161 = memref.load %arg1[%c85] : memref<98xf32, #tpu.memory_space<smem>>
    %162 = vector.extract_strided_slice %6 {offsets = [0, 81], sizes = [1, 256], strides = [1, 1]} : vector<1x358xf32> to vector<1x256xf32>
    %163 = vector.broadcast %160 : f32 to vector<1x256xf32>
    %164 = arith.mulf %163, %162 : vector<1x256xf32>
    %165 = arith.addf %159, %164 : vector<1x256xf32>
    %166 = vector.extract_strided_slice %7 {offsets = [0, 81], sizes = [1, 256], strides = [1, 1]} : vector<1x358xf32> to vector<1x256xf32>
    %167 = vector.broadcast %161 : f32 to vector<1x256xf32>
    %168 = arith.mulf %167, %166 : vector<1x256xf32>
    %169 = arith.addf %165, %168 : vector<1x256xf32>
    %c43 = arith.constant 43 : index
    %170 = memref.load %arg1[%c43] : memref<98xf32, #tpu.memory_space<smem>>
    %c92 = arith.constant 92 : index
    %171 = memref.load %arg1[%c92] : memref<98xf32, #tpu.memory_space<smem>>
    %172 = vector.extract_strided_slice %6 {offsets = [0, 97], sizes = [1, 256], strides = [1, 1]} : vector<1x358xf32> to vector<1x256xf32>
    %173 = vector.broadcast %170 : f32 to vector<1x256xf32>
    %174 = arith.mulf %173, %172 : vector<1x256xf32>
    %175 = arith.addf %169, %174 : vector<1x256xf32>
    %176 = vector.extract_strided_slice %7 {offsets = [0, 97], sizes = [1, 256], strides = [1, 1]} : vector<1x358xf32> to vector<1x256xf32>
    %177 = vector.broadcast %171 : f32 to vector<1x256xf32>
    %178 = arith.mulf %177, %176 : vector<1x256xf32>
    %179 = arith.addf %175, %178 : vector<1x256xf32>
    %c-2_i32 = arith.constant -2 : i32
    %180 = vector.broadcast %c-2_i32 : i32 to vector<1x256xi32>
    %181 = arith.addi %24, %180 : vector<1x256xi32>
    %c0_i32_16 = arith.constant 0 : i32
    %182 = vector.broadcast %c0_i32_16 : i32 to vector<1x256xi32>
    %183 = arith.cmpi sge, %181, %182 : vector<1x256xi32>
    %c-2_i32_17 = arith.constant -2 : i32
    %184 = vector.broadcast %c-2_i32_17 : i32 to vector<1x256xi32>
    %185 = arith.addi %24, %184 : vector<1x256xi32>
    %c16_i32_18 = arith.constant 16 : i32
    %186 = vector.broadcast %c16_i32_18 : i32 to vector<1x256xi32>
    %187 = arith.cmpi slt, %185, %186 : vector<1x256xi32>
    %188 = arith.andi %183, %187 : vector<1x256xi1>
    %cst_19 = arith.constant 0.000000e+00 : f32
    %189 = vector.broadcast %cst_19 : f32 to vector<1x256xf32>
    %190 = arith.select %188, %179, %189 : vector<1x256xi1>, vector<1x256xf32>
    %191 = arith.addf %108, %190 : vector<1x256xf32>
    %cst_20 = arith.constant 0.000000e+00 : f32
    %192 = vector.broadcast %cst_20 : f32 to vector<1x256xf32>
    %c2 = arith.constant 2 : index
    %193 = memref.load %arg1[%c2] : memref<98xf32, #tpu.memory_space<smem>>
    %c51 = arith.constant 51 : index
    %194 = memref.load %arg1[%c51] : memref<98xf32, #tpu.memory_space<smem>>
    %195 = vector.extract_strided_slice %6 {offsets = [0, 2], sizes = [1, 256], strides = [1, 1]} : vector<1x358xf32> to vector<1x256xf32>
    %196 = vector.broadcast %193 : f32 to vector<1x256xf32>
    %197 = arith.mulf %196, %195 : vector<1x256xf32>
    %198 = arith.addf %192, %197 : vector<1x256xf32>
    %199 = vector.extract_strided_slice %7 {offsets = [0, 2], sizes = [1, 256], strides = [1, 1]} : vector<1x358xf32> to vector<1x256xf32>
    %200 = vector.broadcast %194 : f32 to vector<1x256xf32>
    %201 = arith.mulf %200, %199 : vector<1x256xf32>
    %202 = arith.addf %198, %201 : vector<1x256xf32>
    %c9 = arith.constant 9 : index
    %203 = memref.load %arg1[%c9] : memref<98xf32, #tpu.memory_space<smem>>
    %c58 = arith.constant 58 : index
    %204 = memref.load %arg1[%c58] : memref<98xf32, #tpu.memory_space<smem>>
    %205 = vector.extract_strided_slice %6 {offsets = [0, 18], sizes = [1, 256], strides = [1, 1]} : vector<1x358xf32> to vector<1x256xf32>
    %206 = vector.broadcast %203 : f32 to vector<1x256xf32>
    %207 = arith.mulf %206, %205 : vector<1x256xf32>
    %208 = arith.addf %202, %207 : vector<1x256xf32>
    %209 = vector.extract_strided_slice %7 {offsets = [0, 18], sizes = [1, 256], strides = [1, 1]} : vector<1x358xf32> to vector<1x256xf32>
    %210 = vector.broadcast %204 : f32 to vector<1x256xf32>
    %211 = arith.mulf %210, %209 : vector<1x256xf32>
    %212 = arith.addf %208, %211 : vector<1x256xf32>
    %c16 = arith.constant 16 : index
    %213 = memref.load %arg1[%c16] : memref<98xf32, #tpu.memory_space<smem>>
    %c65 = arith.constant 65 : index
    %214 = memref.load %arg1[%c65] : memref<98xf32, #tpu.memory_space<smem>>
    %215 = vector.extract_strided_slice %6 {offsets = [0, 34], sizes = [1, 256], strides = [1, 1]} : vector<1x358xf32> to vector<1x256xf32>
    %216 = vector.broadcast %213 : f32 to vector<1x256xf32>
    %217 = arith.mulf %216, %215 : vector<1x256xf32>
    %218 = arith.addf %212, %217 : vector<1x256xf32>
    %219 = vector.extract_strided_slice %7 {offsets = [0, 34], sizes = [1, 256], strides = [1, 1]} : vector<1x358xf32> to vector<1x256xf32>
    %220 = vector.broadcast %214 : f32 to vector<1x256xf32>
    %221 = arith.mulf %220, %219 : vector<1x256xf32>
    %222 = arith.addf %218, %221 : vector<1x256xf32>
    %c23 = arith.constant 23 : index
    %223 = memref.load %arg1[%c23] : memref<98xf32, #tpu.memory_space<smem>>
    %c72 = arith.constant 72 : index
    %224 = memref.load %arg1[%c72] : memref<98xf32, #tpu.memory_space<smem>>
    %225 = vector.extract_strided_slice %6 {offsets = [0, 50], sizes = [1, 256], strides = [1, 1]} : vector<1x358xf32> to vector<1x256xf32>
    %226 = vector.broadcast %223 : f32 to vector<1x256xf32>
    %227 = arith.mulf %226, %225 : vector<1x256xf32>
    %228 = arith.addf %222, %227 : vector<1x256xf32>
    %229 = vector.extract_strided_slice %7 {offsets = [0, 50], sizes = [1, 256], strides = [1, 1]} : vector<1x358xf32> to vector<1x256xf32>
    %230 = vector.broadcast %224 : f32 to vector<1x256xf32>
    %231 = arith.mulf %230, %229 : vector<1x256xf32>
    %232 = arith.addf %228, %231 : vector<1x256xf32>
    %c30 = arith.constant 30 : index
    %233 = memref.load %arg1[%c30] : memref<98xf32, #tpu.memory_space<smem>>
    %c79 = arith.constant 79 : index
    %234 = memref.load %arg1[%c79] : memref<98xf32, #tpu.memory_space<smem>>
    %235 = vector.extract_strided_slice %6 {offsets = [0, 66], sizes = [1, 256], strides = [1, 1]} : vector<1x358xf32> to vector<1x256xf32>
    %236 = vector.broadcast %233 : f32 to vector<1x256xf32>
    %237 = arith.mulf %236, %235 : vector<1x256xf32>
    %238 = arith.addf %232, %237 : vector<1x256xf32>
    %239 = vector.extract_strided_slice %7 {offsets = [0, 66], sizes = [1, 256], strides = [1, 1]} : vector<1x358xf32> to vector<1x256xf32>
    %240 = vector.broadcast %234 : f32 to vector<1x256xf32>
    %241 = arith.mulf %240, %239 : vector<1x256xf32>
    %242 = arith.addf %238, %241 : vector<1x256xf32>
    %c37 = arith.constant 37 : index
    %243 = memref.load %arg1[%c37] : memref<98xf32, #tpu.memory_space<smem>>
    %c86 = arith.constant 86 : index
    %244 = memref.load %arg1[%c86] : memref<98xf32, #tpu.memory_space<smem>>
    %245 = vector.extract_strided_slice %6 {offsets = [0, 82], sizes = [1, 256], strides = [1, 1]} : vector<1x358xf32> to vector<1x256xf32>
    %246 = vector.broadcast %243 : f32 to vector<1x256xf32>
    %247 = arith.mulf %246, %245 : vector<1x256xf32>
    %248 = arith.addf %242, %247 : vector<1x256xf32>
    %249 = vector.extract_strided_slice %7 {offsets = [0, 82], sizes = [1, 256], strides = [1, 1]} : vector<1x358xf32> to vector<1x256xf32>
    %250 = vector.broadcast %244 : f32 to vector<1x256xf32>
    %251 = arith.mulf %250, %249 : vector<1x256xf32>
    %252 = arith.addf %248, %251 : vector<1x256xf32>
    %c44 = arith.constant 44 : index
    %253 = memref.load %arg1[%c44] : memref<98xf32, #tpu.memory_space<smem>>
    %c93 = arith.constant 93 : index
    %254 = memref.load %arg1[%c93] : memref<98xf32, #tpu.memory_space<smem>>
    %255 = vector.extract_strided_slice %6 {offsets = [0, 98], sizes = [1, 256], strides = [1, 1]} : vector<1x358xf32> to vector<1x256xf32>
    %256 = vector.broadcast %253 : f32 to vector<1x256xf32>
    %257 = arith.mulf %256, %255 : vector<1x256xf32>
    %258 = arith.addf %252, %257 : vector<1x256xf32>
    %259 = vector.extract_strided_slice %7 {offsets = [0, 98], sizes = [1, 256], strides = [1, 1]} : vector<1x358xf32> to vector<1x256xf32>
    %260 = vector.broadcast %254 : f32 to vector<1x256xf32>
    %261 = arith.mulf %260, %259 : vector<1x256xf32>
    %262 = arith.addf %258, %261 : vector<1x256xf32>
    %c-1_i32 = arith.constant -1 : i32
    %263 = vector.broadcast %c-1_i32 : i32 to vector<1x256xi32>
    %264 = arith.addi %24, %263 : vector<1x256xi32>
    %c0_i32_21 = arith.constant 0 : i32
    %265 = vector.broadcast %c0_i32_21 : i32 to vector<1x256xi32>
    %266 = arith.cmpi sge, %264, %265 : vector<1x256xi32>
    %c-1_i32_22 = arith.constant -1 : i32
    %267 = vector.broadcast %c-1_i32_22 : i32 to vector<1x256xi32>
    %268 = arith.addi %24, %267 : vector<1x256xi32>
    %c16_i32_23 = arith.constant 16 : i32
    %269 = vector.broadcast %c16_i32_23 : i32 to vector<1x256xi32>
    %270 = arith.cmpi slt, %268, %269 : vector<1x256xi32>
    %271 = arith.andi %266, %270 : vector<1x256xi1>
    %cst_24 = arith.constant 0.000000e+00 : f32
    %272 = vector.broadcast %cst_24 : f32 to vector<1x256xf32>
    %273 = arith.select %271, %262, %272 : vector<1x256xi1>, vector<1x256xf32>
    %274 = arith.addf %191, %273 : vector<1x256xf32>
    %cst_25 = arith.constant 0.000000e+00 : f32
    %275 = vector.broadcast %cst_25 : f32 to vector<1x256xf32>
    %c3 = arith.constant 3 : index
    %276 = memref.load %arg1[%c3] : memref<98xf32, #tpu.memory_space<smem>>
    %c52 = arith.constant 52 : index
    %277 = memref.load %arg1[%c52] : memref<98xf32, #tpu.memory_space<smem>>
    %278 = vector.extract_strided_slice %6 {offsets = [0, 3], sizes = [1, 256], strides = [1, 1]} : vector<1x358xf32> to vector<1x256xf32>
    %279 = vector.broadcast %276 : f32 to vector<1x256xf32>
    %280 = arith.mulf %279, %278 : vector<1x256xf32>
    %281 = arith.addf %275, %280 : vector<1x256xf32>
    %282 = vector.extract_strided_slice %7 {offsets = [0, 3], sizes = [1, 256], strides = [1, 1]} : vector<1x358xf32> to vector<1x256xf32>
    %283 = vector.broadcast %277 : f32 to vector<1x256xf32>
    %284 = arith.mulf %283, %282 : vector<1x256xf32>
    %285 = arith.addf %281, %284 : vector<1x256xf32>
    %c10 = arith.constant 10 : index
    %286 = memref.load %arg1[%c10] : memref<98xf32, #tpu.memory_space<smem>>
    %c59 = arith.constant 59 : index
    %287 = memref.load %arg1[%c59] : memref<98xf32, #tpu.memory_space<smem>>
    %288 = vector.extract_strided_slice %6 {offsets = [0, 19], sizes = [1, 256], strides = [1, 1]} : vector<1x358xf32> to vector<1x256xf32>
    %289 = vector.broadcast %286 : f32 to vector<1x256xf32>
    %290 = arith.mulf %289, %288 : vector<1x256xf32>
    %291 = arith.addf %285, %290 : vector<1x256xf32>
    %292 = vector.extract_strided_slice %7 {offsets = [0, 19], sizes = [1, 256], strides = [1, 1]} : vector<1x358xf32> to vector<1x256xf32>
    %293 = vector.broadcast %287 : f32 to vector<1x256xf32>
    %294 = arith.mulf %293, %292 : vector<1x256xf32>
    %295 = arith.addf %291, %294 : vector<1x256xf32>
    %c17 = arith.constant 17 : index
    %296 = memref.load %arg1[%c17] : memref<98xf32, #tpu.memory_space<smem>>
    %c66 = arith.constant 66 : index
    %297 = memref.load %arg1[%c66] : memref<98xf32, #tpu.memory_space<smem>>
    %298 = vector.extract_strided_slice %6 {offsets = [0, 35], sizes = [1, 256], strides = [1, 1]} : vector<1x358xf32> to vector<1x256xf32>
    %299 = vector.broadcast %296 : f32 to vector<1x256xf32>
    %300 = arith.mulf %299, %298 : vector<1x256xf32>
    %301 = arith.addf %295, %300 : vector<1x256xf32>
    %302 = vector.extract_strided_slice %7 {offsets = [0, 35], sizes = [1, 256], strides = [1, 1]} : vector<1x358xf32> to vector<1x256xf32>
    %303 = vector.broadcast %297 : f32 to vector<1x256xf32>
    %304 = arith.mulf %303, %302 : vector<1x256xf32>
    %305 = arith.addf %301, %304 : vector<1x256xf32>
    %c24 = arith.constant 24 : index
    %306 = memref.load %arg1[%c24] : memref<98xf32, #tpu.memory_space<smem>>
    %c73 = arith.constant 73 : index
    %307 = memref.load %arg1[%c73] : memref<98xf32, #tpu.memory_space<smem>>
    %308 = vector.extract_strided_slice %6 {offsets = [0, 51], sizes = [1, 256], strides = [1, 1]} : vector<1x358xf32> to vector<1x256xf32>
    %309 = vector.broadcast %306 : f32 to vector<1x256xf32>
    %310 = arith.mulf %309, %308 : vector<1x256xf32>
    %311 = arith.addf %305, %310 : vector<1x256xf32>
    %312 = vector.extract_strided_slice %7 {offsets = [0, 51], sizes = [1, 256], strides = [1, 1]} : vector<1x358xf32> to vector<1x256xf32>
    %313 = vector.broadcast %307 : f32 to vector<1x256xf32>
    %314 = arith.mulf %313, %312 : vector<1x256xf32>
    %315 = arith.addf %311, %314 : vector<1x256xf32>
    %c31 = arith.constant 31 : index
    %316 = memref.load %arg1[%c31] : memref<98xf32, #tpu.memory_space<smem>>
    %c80 = arith.constant 80 : index
    %317 = memref.load %arg1[%c80] : memref<98xf32, #tpu.memory_space<smem>>
    %318 = vector.extract_strided_slice %6 {offsets = [0, 67], sizes = [1, 256], strides = [1, 1]} : vector<1x358xf32> to vector<1x256xf32>
    %319 = vector.broadcast %316 : f32 to vector<1x256xf32>
    %320 = arith.mulf %319, %318 : vector<1x256xf32>
    %321 = arith.addf %315, %320 : vector<1x256xf32>
    %322 = vector.extract_strided_slice %7 {offsets = [0, 67], sizes = [1, 256], strides = [1, 1]} : vector<1x358xf32> to vector<1x256xf32>
    %323 = vector.broadcast %317 : f32 to vector<1x256xf32>
    %324 = arith.mulf %323, %322 : vector<1x256xf32>
    %325 = arith.addf %321, %324 : vector<1x256xf32>
    %c38 = arith.constant 38 : index
    %326 = memref.load %arg1[%c38] : memref<98xf32, #tpu.memory_space<smem>>
    %c87 = arith.constant 87 : index
    %327 = memref.load %arg1[%c87] : memref<98xf32, #tpu.memory_space<smem>>
    %328 = vector.extract_strided_slice %6 {offsets = [0, 83], sizes = [1, 256], strides = [1, 1]} : vector<1x358xf32> to vector<1x256xf32>
    %329 = vector.broadcast %326 : f32 to vector<1x256xf32>
    %330 = arith.mulf %329, %328 : vector<1x256xf32>
    %331 = arith.addf %325, %330 : vector<1x256xf32>
    %332 = vector.extract_strided_slice %7 {offsets = [0, 83], sizes = [1, 256], strides = [1, 1]} : vector<1x358xf32> to vector<1x256xf32>
    %333 = vector.broadcast %327 : f32 to vector<1x256xf32>
    %334 = arith.mulf %333, %332 : vector<1x256xf32>
    %335 = arith.addf %331, %334 : vector<1x256xf32>
    %c45 = arith.constant 45 : index
    %336 = memref.load %arg1[%c45] : memref<98xf32, #tpu.memory_space<smem>>
    %c94 = arith.constant 94 : index
    %337 = memref.load %arg1[%c94] : memref<98xf32, #tpu.memory_space<smem>>
    %338 = vector.extract_strided_slice %6 {offsets = [0, 99], sizes = [1, 256], strides = [1, 1]} : vector<1x358xf32> to vector<1x256xf32>
    %339 = vector.broadcast %336 : f32 to vector<1x256xf32>
    %340 = arith.mulf %339, %338 : vector<1x256xf32>
    %341 = arith.addf %335, %340 : vector<1x256xf32>
    %342 = vector.extract_strided_slice %7 {offsets = [0, 99], sizes = [1, 256], strides = [1, 1]} : vector<1x358xf32> to vector<1x256xf32>
    %343 = vector.broadcast %337 : f32 to vector<1x256xf32>
    %344 = arith.mulf %343, %342 : vector<1x256xf32>
    %345 = arith.addf %341, %344 : vector<1x256xf32>
    %346 = arith.addf %274, %345 : vector<1x256xf32>
    %cst_26 = arith.constant 0.000000e+00 : f32
    %347 = vector.broadcast %cst_26 : f32 to vector<1x256xf32>
    %c4 = arith.constant 4 : index
    %348 = memref.load %arg1[%c4] : memref<98xf32, #tpu.memory_space<smem>>
    %c53 = arith.constant 53 : index
    %349 = memref.load %arg1[%c53] : memref<98xf32, #tpu.memory_space<smem>>
    %350 = vector.extract_strided_slice %6 {offsets = [0, 4], sizes = [1, 256], strides = [1, 1]} : vector<1x358xf32> to vector<1x256xf32>
    %351 = vector.broadcast %348 : f32 to vector<1x256xf32>
    %352 = arith.mulf %351, %350 : vector<1x256xf32>
    %353 = arith.addf %347, %352 : vector<1x256xf32>
    %354 = vector.extract_strided_slice %7 {offsets = [0, 4], sizes = [1, 256], strides = [1, 1]} : vector<1x358xf32> to vector<1x256xf32>
    %355 = vector.broadcast %349 : f32 to vector<1x256xf32>
    %356 = arith.mulf %355, %354 : vector<1x256xf32>
    %357 = arith.addf %353, %356 : vector<1x256xf32>
    %c11 = arith.constant 11 : index
    %358 = memref.load %arg1[%c11] : memref<98xf32, #tpu.memory_space<smem>>
    %c60 = arith.constant 60 : index
    %359 = memref.load %arg1[%c60] : memref<98xf32, #tpu.memory_space<smem>>
    %360 = vector.extract_strided_slice %6 {offsets = [0, 20], sizes = [1, 256], strides = [1, 1]} : vector<1x358xf32> to vector<1x256xf32>
    %361 = vector.broadcast %358 : f32 to vector<1x256xf32>
    %362 = arith.mulf %361, %360 : vector<1x256xf32>
    %363 = arith.addf %357, %362 : vector<1x256xf32>
    %364 = vector.extract_strided_slice %7 {offsets = [0, 20], sizes = [1, 256], strides = [1, 1]} : vector<1x358xf32> to vector<1x256xf32>
    %365 = vector.broadcast %359 : f32 to vector<1x256xf32>
    %366 = arith.mulf %365, %364 : vector<1x256xf32>
    %367 = arith.addf %363, %366 : vector<1x256xf32>
    %c18 = arith.constant 18 : index
    %368 = memref.load %arg1[%c18] : memref<98xf32, #tpu.memory_space<smem>>
    %c67 = arith.constant 67 : index
    %369 = memref.load %arg1[%c67] : memref<98xf32, #tpu.memory_space<smem>>
    %370 = vector.extract_strided_slice %6 {offsets = [0, 36], sizes = [1, 256], strides = [1, 1]} : vector<1x358xf32> to vector<1x256xf32>
    %371 = vector.broadcast %368 : f32 to vector<1x256xf32>
    %372 = arith.mulf %371, %370 : vector<1x256xf32>
    %373 = arith.addf %367, %372 : vector<1x256xf32>
    %374 = vector.extract_strided_slice %7 {offsets = [0, 36], sizes = [1, 256], strides = [1, 1]} : vector<1x358xf32> to vector<1x256xf32>
    %375 = vector.broadcast %369 : f32 to vector<1x256xf32>
    %376 = arith.mulf %375, %374 : vector<1x256xf32>
    %377 = arith.addf %373, %376 : vector<1x256xf32>
    %c25 = arith.constant 25 : index
    %378 = memref.load %arg1[%c25] : memref<98xf32, #tpu.memory_space<smem>>
    %c74 = arith.constant 74 : index
    %379 = memref.load %arg1[%c74] : memref<98xf32, #tpu.memory_space<smem>>
    %380 = vector.extract_strided_slice %6 {offsets = [0, 52], sizes = [1, 256], strides = [1, 1]} : vector<1x358xf32> to vector<1x256xf32>
    %381 = vector.broadcast %378 : f32 to vector<1x256xf32>
    %382 = arith.mulf %381, %380 : vector<1x256xf32>
    %383 = arith.addf %377, %382 : vector<1x256xf32>
    %384 = vector.extract_strided_slice %7 {offsets = [0, 52], sizes = [1, 256], strides = [1, 1]} : vector<1x358xf32> to vector<1x256xf32>
    %385 = vector.broadcast %379 : f32 to vector<1x256xf32>
    %386 = arith.mulf %385, %384 : vector<1x256xf32>
    %387 = arith.addf %383, %386 : vector<1x256xf32>
    %c32 = arith.constant 32 : index
    %388 = memref.load %arg1[%c32] : memref<98xf32, #tpu.memory_space<smem>>
    %c81 = arith.constant 81 : index
    %389 = memref.load %arg1[%c81] : memref<98xf32, #tpu.memory_space<smem>>
    %390 = vector.extract_strided_slice %6 {offsets = [0, 68], sizes = [1, 256], strides = [1, 1]} : vector<1x358xf32> to vector<1x256xf32>
    %391 = vector.broadcast %388 : f32 to vector<1x256xf32>
    %392 = arith.mulf %391, %390 : vector<1x256xf32>
    %393 = arith.addf %387, %392 : vector<1x256xf32>
    %394 = vector.extract_strided_slice %7 {offsets = [0, 68], sizes = [1, 256], strides = [1, 1]} : vector<1x358xf32> to vector<1x256xf32>
    %395 = vector.broadcast %389 : f32 to vector<1x256xf32>
    %396 = arith.mulf %395, %394 : vector<1x256xf32>
    %397 = arith.addf %393, %396 : vector<1x256xf32>
    %c39 = arith.constant 39 : index
    %398 = memref.load %arg1[%c39] : memref<98xf32, #tpu.memory_space<smem>>
    %c88 = arith.constant 88 : index
    %399 = memref.load %arg1[%c88] : memref<98xf32, #tpu.memory_space<smem>>
    %400 = vector.extract_strided_slice %6 {offsets = [0, 84], sizes = [1, 256], strides = [1, 1]} : vector<1x358xf32> to vector<1x256xf32>
    %401 = vector.broadcast %398 : f32 to vector<1x256xf32>
    %402 = arith.mulf %401, %400 : vector<1x256xf32>
    %403 = arith.addf %397, %402 : vector<1x256xf32>
    %404 = vector.extract_strided_slice %7 {offsets = [0, 84], sizes = [1, 256], strides = [1, 1]} : vector<1x358xf32> to vector<1x256xf32>
    %405 = vector.broadcast %399 : f32 to vector<1x256xf32>
    %406 = arith.mulf %405, %404 : vector<1x256xf32>
    %407 = arith.addf %403, %406 : vector<1x256xf32>
    %c46 = arith.constant 46 : index
    %408 = memref.load %arg1[%c46] : memref<98xf32, #tpu.memory_space<smem>>
    %c95 = arith.constant 95 : index
    %409 = memref.load %arg1[%c95] : memref<98xf32, #tpu.memory_space<smem>>
    %410 = vector.extract_strided_slice %6 {offsets = [0, 100], sizes = [1, 256], strides = [1, 1]} : vector<1x358xf32> to vector<1x256xf32>
    %411 = vector.broadcast %408 : f32 to vector<1x256xf32>
    %412 = arith.mulf %411, %410 : vector<1x256xf32>
    %413 = arith.addf %407, %412 : vector<1x256xf32>
    %414 = vector.extract_strided_slice %7 {offsets = [0, 100], sizes = [1, 256], strides = [1, 1]} : vector<1x358xf32> to vector<1x256xf32>
    %415 = vector.broadcast %409 : f32 to vector<1x256xf32>
    %416 = arith.mulf %415, %414 : vector<1x256xf32>
    %417 = arith.addf %413, %416 : vector<1x256xf32>
    %c1_i32_27 = arith.constant 1 : i32
    %418 = vector.broadcast %c1_i32_27 : i32 to vector<1x256xi32>
    %419 = arith.addi %24, %418 : vector<1x256xi32>
    %c0_i32_28 = arith.constant 0 : i32
    %420 = vector.broadcast %c0_i32_28 : i32 to vector<1x256xi32>
    %421 = arith.cmpi sge, %419, %420 : vector<1x256xi32>
    %c1_i32_29 = arith.constant 1 : i32
    %422 = vector.broadcast %c1_i32_29 : i32 to vector<1x256xi32>
    %423 = arith.addi %24, %422 : vector<1x256xi32>
    %c16_i32_30 = arith.constant 16 : i32
    %424 = vector.broadcast %c16_i32_30 : i32 to vector<1x256xi32>
    %425 = arith.cmpi slt, %423, %424 : vector<1x256xi32>
    %426 = arith.andi %421, %425 : vector<1x256xi1>
    %cst_31 = arith.constant 0.000000e+00 : f32
    %427 = vector.broadcast %cst_31 : f32 to vector<1x256xf32>
    %428 = arith.select %426, %417, %427 : vector<1x256xi1>, vector<1x256xf32>
    %429 = arith.addf %346, %428 : vector<1x256xf32>
    %cst_32 = arith.constant 0.000000e+00 : f32
    %430 = vector.broadcast %cst_32 : f32 to vector<1x256xf32>
    %c5 = arith.constant 5 : index
    %431 = memref.load %arg1[%c5] : memref<98xf32, #tpu.memory_space<smem>>
    %c54 = arith.constant 54 : index
    %432 = memref.load %arg1[%c54] : memref<98xf32, #tpu.memory_space<smem>>
    %433 = vector.extract_strided_slice %6 {offsets = [0, 5], sizes = [1, 256], strides = [1, 1]} : vector<1x358xf32> to vector<1x256xf32>
    %434 = vector.broadcast %431 : f32 to vector<1x256xf32>
    %435 = arith.mulf %434, %433 : vector<1x256xf32>
    %436 = arith.addf %430, %435 : vector<1x256xf32>
    %437 = vector.extract_strided_slice %7 {offsets = [0, 5], sizes = [1, 256], strides = [1, 1]} : vector<1x358xf32> to vector<1x256xf32>
    %438 = vector.broadcast %432 : f32 to vector<1x256xf32>
    %439 = arith.mulf %438, %437 : vector<1x256xf32>
    %440 = arith.addf %436, %439 : vector<1x256xf32>
    %c12 = arith.constant 12 : index
    %441 = memref.load %arg1[%c12] : memref<98xf32, #tpu.memory_space<smem>>
    %c61 = arith.constant 61 : index
    %442 = memref.load %arg1[%c61] : memref<98xf32, #tpu.memory_space<smem>>
    %443 = vector.extract_strided_slice %6 {offsets = [0, 21], sizes = [1, 256], strides = [1, 1]} : vector<1x358xf32> to vector<1x256xf32>
    %444 = vector.broadcast %441 : f32 to vector<1x256xf32>
    %445 = arith.mulf %444, %443 : vector<1x256xf32>
    %446 = arith.addf %440, %445 : vector<1x256xf32>
    %447 = vector.extract_strided_slice %7 {offsets = [0, 21], sizes = [1, 256], strides = [1, 1]} : vector<1x358xf32> to vector<1x256xf32>
    %448 = vector.broadcast %442 : f32 to vector<1x256xf32>
    %449 = arith.mulf %448, %447 : vector<1x256xf32>
    %450 = arith.addf %446, %449 : vector<1x256xf32>
    %c19 = arith.constant 19 : index
    %451 = memref.load %arg1[%c19] : memref<98xf32, #tpu.memory_space<smem>>
    %c68 = arith.constant 68 : index
    %452 = memref.load %arg1[%c68] : memref<98xf32, #tpu.memory_space<smem>>
    %453 = vector.extract_strided_slice %6 {offsets = [0, 37], sizes = [1, 256], strides = [1, 1]} : vector<1x358xf32> to vector<1x256xf32>
    %454 = vector.broadcast %451 : f32 to vector<1x256xf32>
    %455 = arith.mulf %454, %453 : vector<1x256xf32>
    %456 = arith.addf %450, %455 : vector<1x256xf32>
    %457 = vector.extract_strided_slice %7 {offsets = [0, 37], sizes = [1, 256], strides = [1, 1]} : vector<1x358xf32> to vector<1x256xf32>
    %458 = vector.broadcast %452 : f32 to vector<1x256xf32>
    %459 = arith.mulf %458, %457 : vector<1x256xf32>
    %460 = arith.addf %456, %459 : vector<1x256xf32>
    %c26 = arith.constant 26 : index
    %461 = memref.load %arg1[%c26] : memref<98xf32, #tpu.memory_space<smem>>
    %c75 = arith.constant 75 : index
    %462 = memref.load %arg1[%c75] : memref<98xf32, #tpu.memory_space<smem>>
    %463 = vector.extract_strided_slice %6 {offsets = [0, 53], sizes = [1, 256], strides = [1, 1]} : vector<1x358xf32> to vector<1x256xf32>
    %464 = vector.broadcast %461 : f32 to vector<1x256xf32>
    %465 = arith.mulf %464, %463 : vector<1x256xf32>
    %466 = arith.addf %460, %465 : vector<1x256xf32>
    %467 = vector.extract_strided_slice %7 {offsets = [0, 53], sizes = [1, 256], strides = [1, 1]} : vector<1x358xf32> to vector<1x256xf32>
    %468 = vector.broadcast %462 : f32 to vector<1x256xf32>
    %469 = arith.mulf %468, %467 : vector<1x256xf32>
    %470 = arith.addf %466, %469 : vector<1x256xf32>
    %c33 = arith.constant 33 : index
    %471 = memref.load %arg1[%c33] : memref<98xf32, #tpu.memory_space<smem>>
    %c82 = arith.constant 82 : index
    %472 = memref.load %arg1[%c82] : memref<98xf32, #tpu.memory_space<smem>>
    %473 = vector.extract_strided_slice %6 {offsets = [0, 69], sizes = [1, 256], strides = [1, 1]} : vector<1x358xf32> to vector<1x256xf32>
    %474 = vector.broadcast %471 : f32 to vector<1x256xf32>
    %475 = arith.mulf %474, %473 : vector<1x256xf32>
    %476 = arith.addf %470, %475 : vector<1x256xf32>
    %477 = vector.extract_strided_slice %7 {offsets = [0, 69], sizes = [1, 256], strides = [1, 1]} : vector<1x358xf32> to vector<1x256xf32>
    %478 = vector.broadcast %472 : f32 to vector<1x256xf32>
    %479 = arith.mulf %478, %477 : vector<1x256xf32>
    %480 = arith.addf %476, %479 : vector<1x256xf32>
    %c40 = arith.constant 40 : index
    %481 = memref.load %arg1[%c40] : memref<98xf32, #tpu.memory_space<smem>>
    %c89 = arith.constant 89 : index
    %482 = memref.load %arg1[%c89] : memref<98xf32, #tpu.memory_space<smem>>
    %483 = vector.extract_strided_slice %6 {offsets = [0, 85], sizes = [1, 256], strides = [1, 1]} : vector<1x358xf32> to vector<1x256xf32>
    %484 = vector.broadcast %481 : f32 to vector<1x256xf32>
    %485 = arith.mulf %484, %483 : vector<1x256xf32>
    %486 = arith.addf %480, %485 : vector<1x256xf32>
    %487 = vector.extract_strided_slice %7 {offsets = [0, 85], sizes = [1, 256], strides = [1, 1]} : vector<1x358xf32> to vector<1x256xf32>
    %488 = vector.broadcast %482 : f32 to vector<1x256xf32>
    %489 = arith.mulf %488, %487 : vector<1x256xf32>
    %490 = arith.addf %486, %489 : vector<1x256xf32>
    %c47 = arith.constant 47 : index
    %491 = memref.load %arg1[%c47] : memref<98xf32, #tpu.memory_space<smem>>
    %c96 = arith.constant 96 : index
    %492 = memref.load %arg1[%c96] : memref<98xf32, #tpu.memory_space<smem>>
    %493 = vector.extract_strided_slice %6 {offsets = [0, 101], sizes = [1, 256], strides = [1, 1]} : vector<1x358xf32> to vector<1x256xf32>
    %494 = vector.broadcast %491 : f32 to vector<1x256xf32>
    %495 = arith.mulf %494, %493 : vector<1x256xf32>
    %496 = arith.addf %490, %495 : vector<1x256xf32>
    %497 = vector.extract_strided_slice %7 {offsets = [0, 101], sizes = [1, 256], strides = [1, 1]} : vector<1x358xf32> to vector<1x256xf32>
    %498 = vector.broadcast %492 : f32 to vector<1x256xf32>
    %499 = arith.mulf %498, %497 : vector<1x256xf32>
    %500 = arith.addf %496, %499 : vector<1x256xf32>
    %c2_i32 = arith.constant 2 : i32
    %501 = vector.broadcast %c2_i32 : i32 to vector<1x256xi32>
    %502 = arith.addi %24, %501 : vector<1x256xi32>
    %c0_i32_33 = arith.constant 0 : i32
    %503 = vector.broadcast %c0_i32_33 : i32 to vector<1x256xi32>
    %504 = arith.cmpi sge, %502, %503 : vector<1x256xi32>
    %c2_i32_34 = arith.constant 2 : i32
    %505 = vector.broadcast %c2_i32_34 : i32 to vector<1x256xi32>
    %506 = arith.addi %24, %505 : vector<1x256xi32>
    %c16_i32_35 = arith.constant 16 : i32
    %507 = vector.broadcast %c16_i32_35 : i32 to vector<1x256xi32>
    %508 = arith.cmpi slt, %506, %507 : vector<1x256xi32>
    %509 = arith.andi %504, %508 : vector<1x256xi1>
    %cst_36 = arith.constant 0.000000e+00 : f32
    %510 = vector.broadcast %cst_36 : f32 to vector<1x256xf32>
    %511 = arith.select %509, %500, %510 : vector<1x256xi1>, vector<1x256xf32>
    %512 = arith.addf %429, %511 : vector<1x256xf32>
    %cst_37 = arith.constant 0.000000e+00 : f32
    %513 = vector.broadcast %cst_37 : f32 to vector<1x256xf32>
    %c6 = arith.constant 6 : index
    %514 = memref.load %arg1[%c6] : memref<98xf32, #tpu.memory_space<smem>>
    %c55 = arith.constant 55 : index
    %515 = memref.load %arg1[%c55] : memref<98xf32, #tpu.memory_space<smem>>
    %516 = vector.extract_strided_slice %6 {offsets = [0, 6], sizes = [1, 256], strides = [1, 1]} : vector<1x358xf32> to vector<1x256xf32>
    %517 = vector.broadcast %514 : f32 to vector<1x256xf32>
    %518 = arith.mulf %517, %516 : vector<1x256xf32>
    %519 = arith.addf %513, %518 : vector<1x256xf32>
    %520 = vector.extract_strided_slice %7 {offsets = [0, 6], sizes = [1, 256], strides = [1, 1]} : vector<1x358xf32> to vector<1x256xf32>
    %521 = vector.broadcast %515 : f32 to vector<1x256xf32>
    %522 = arith.mulf %521, %520 : vector<1x256xf32>
    %523 = arith.addf %519, %522 : vector<1x256xf32>
    %c13 = arith.constant 13 : index
    %524 = memref.load %arg1[%c13] : memref<98xf32, #tpu.memory_space<smem>>
    %c62 = arith.constant 62 : index
    %525 = memref.load %arg1[%c62] : memref<98xf32, #tpu.memory_space<smem>>
    %526 = vector.extract_strided_slice %6 {offsets = [0, 22], sizes = [1, 256], strides = [1, 1]} : vector<1x358xf32> to vector<1x256xf32>
    %527 = vector.broadcast %524 : f32 to vector<1x256xf32>
    %528 = arith.mulf %527, %526 : vector<1x256xf32>
    %529 = arith.addf %523, %528 : vector<1x256xf32>
    %530 = vector.extract_strided_slice %7 {offsets = [0, 22], sizes = [1, 256], strides = [1, 1]} : vector<1x358xf32> to vector<1x256xf32>
    %531 = vector.broadcast %525 : f32 to vector<1x256xf32>
    %532 = arith.mulf %531, %530 : vector<1x256xf32>
    %533 = arith.addf %529, %532 : vector<1x256xf32>
    %c20 = arith.constant 20 : index
    %534 = memref.load %arg1[%c20] : memref<98xf32, #tpu.memory_space<smem>>
    %c69 = arith.constant 69 : index
    %535 = memref.load %arg1[%c69] : memref<98xf32, #tpu.memory_space<smem>>
    %536 = vector.extract_strided_slice %6 {offsets = [0, 38], sizes = [1, 256], strides = [1, 1]} : vector<1x358xf32> to vector<1x256xf32>
    %537 = vector.broadcast %534 : f32 to vector<1x256xf32>
    %538 = arith.mulf %537, %536 : vector<1x256xf32>
    %539 = arith.addf %533, %538 : vector<1x256xf32>
    %540 = vector.extract_strided_slice %7 {offsets = [0, 38], sizes = [1, 256], strides = [1, 1]} : vector<1x358xf32> to vector<1x256xf32>
    %541 = vector.broadcast %535 : f32 to vector<1x256xf32>
    %542 = arith.mulf %541, %540 : vector<1x256xf32>
    %543 = arith.addf %539, %542 : vector<1x256xf32>
    %c27 = arith.constant 27 : index
    %544 = memref.load %arg1[%c27] : memref<98xf32, #tpu.memory_space<smem>>
    %c76 = arith.constant 76 : index
    %545 = memref.load %arg1[%c76] : memref<98xf32, #tpu.memory_space<smem>>
    %546 = vector.extract_strided_slice %6 {offsets = [0, 54], sizes = [1, 256], strides = [1, 1]} : vector<1x358xf32> to vector<1x256xf32>
    %547 = vector.broadcast %544 : f32 to vector<1x256xf32>
    %548 = arith.mulf %547, %546 : vector<1x256xf32>
    %549 = arith.addf %543, %548 : vector<1x256xf32>
    %550 = vector.extract_strided_slice %7 {offsets = [0, 54], sizes = [1, 256], strides = [1, 1]} : vector<1x358xf32> to vector<1x256xf32>
    %551 = vector.broadcast %545 : f32 to vector<1x256xf32>
    %552 = arith.mulf %551, %550 : vector<1x256xf32>
    %553 = arith.addf %549, %552 : vector<1x256xf32>
    %c34 = arith.constant 34 : index
    %554 = memref.load %arg1[%c34] : memref<98xf32, #tpu.memory_space<smem>>
    %c83 = arith.constant 83 : index
    %555 = memref.load %arg1[%c83] : memref<98xf32, #tpu.memory_space<smem>>
    %556 = vector.extract_strided_slice %6 {offsets = [0, 70], sizes = [1, 256], strides = [1, 1]} : vector<1x358xf32> to vector<1x256xf32>
    %557 = vector.broadcast %554 : f32 to vector<1x256xf32>
    %558 = arith.mulf %557, %556 : vector<1x256xf32>
    %559 = arith.addf %553, %558 : vector<1x256xf32>
    %560 = vector.extract_strided_slice %7 {offsets = [0, 70], sizes = [1, 256], strides = [1, 1]} : vector<1x358xf32> to vector<1x256xf32>
    %561 = vector.broadcast %555 : f32 to vector<1x256xf32>
    %562 = arith.mulf %561, %560 : vector<1x256xf32>
    %563 = arith.addf %559, %562 : vector<1x256xf32>
    %c41 = arith.constant 41 : index
    %564 = memref.load %arg1[%c41] : memref<98xf32, #tpu.memory_space<smem>>
    %c90 = arith.constant 90 : index
    %565 = memref.load %arg1[%c90] : memref<98xf32, #tpu.memory_space<smem>>
    %566 = vector.extract_strided_slice %6 {offsets = [0, 86], sizes = [1, 256], strides = [1, 1]} : vector<1x358xf32> to vector<1x256xf32>
    %567 = vector.broadcast %564 : f32 to vector<1x256xf32>
    %568 = arith.mulf %567, %566 : vector<1x256xf32>
    %569 = arith.addf %563, %568 : vector<1x256xf32>
    %570 = vector.extract_strided_slice %7 {offsets = [0, 86], sizes = [1, 256], strides = [1, 1]} : vector<1x358xf32> to vector<1x256xf32>
    %571 = vector.broadcast %565 : f32 to vector<1x256xf32>
    %572 = arith.mulf %571, %570 : vector<1x256xf32>
    %573 = arith.addf %569, %572 : vector<1x256xf32>
    %c48 = arith.constant 48 : index
    %574 = memref.load %arg1[%c48] : memref<98xf32, #tpu.memory_space<smem>>
    %c97 = arith.constant 97 : index
    %575 = memref.load %arg1[%c97] : memref<98xf32, #tpu.memory_space<smem>>
    %576 = vector.extract_strided_slice %6 {offsets = [0, 102], sizes = [1, 256], strides = [1, 1]} : vector<1x358xf32> to vector<1x256xf32>
    %577 = vector.broadcast %574 : f32 to vector<1x256xf32>
    %578 = arith.mulf %577, %576 : vector<1x256xf32>
    %579 = arith.addf %573, %578 : vector<1x256xf32>
    %580 = vector.extract_strided_slice %7 {offsets = [0, 102], sizes = [1, 256], strides = [1, 1]} : vector<1x358xf32> to vector<1x256xf32>
    %581 = vector.broadcast %575 : f32 to vector<1x256xf32>
    %582 = arith.mulf %581, %580 : vector<1x256xf32>
    %583 = arith.addf %579, %582 : vector<1x256xf32>
    %c3_i32 = arith.constant 3 : i32
    %584 = vector.broadcast %c3_i32 : i32 to vector<1x256xi32>
    %585 = arith.addi %24, %584 : vector<1x256xi32>
    %c0_i32_38 = arith.constant 0 : i32
    %586 = vector.broadcast %c0_i32_38 : i32 to vector<1x256xi32>
    %587 = arith.cmpi sge, %585, %586 : vector<1x256xi32>
    %c3_i32_39 = arith.constant 3 : i32
    %588 = vector.broadcast %c3_i32_39 : i32 to vector<1x256xi32>
    %589 = arith.addi %24, %588 : vector<1x256xi32>
    %c16_i32_40 = arith.constant 16 : i32
    %590 = vector.broadcast %c16_i32_40 : i32 to vector<1x256xi32>
    %591 = arith.cmpi slt, %589, %590 : vector<1x256xi32>
    %592 = arith.andi %587, %591 : vector<1x256xi1>
    %cst_41 = arith.constant 0.000000e+00 : f32
    %593 = vector.broadcast %cst_41 : f32 to vector<1x256xf32>
    %594 = arith.select %592, %583, %593 : vector<1x256xi1>, vector<1x256xf32>
    %595 = arith.addf %512, %594 : vector<1x256xf32>
    %596 = arith.negf %595 : vector<1x256xf32>
    %597 = math.exp %596 : vector<1x256xf32>
    %cst_42 = arith.constant 1.000000e+00 : f32
    %598 = vector.broadcast %cst_42 : f32 to vector<1x256xf32>
    %599 = arith.addf %598, %597 : vector<1x256xf32>
    %600 = arith.divf %598, %599 : vector<1x256xf32>
    %601 = vector.shape_cast %600 : vector<1x256xf32> to vector<1x1x256xf32>
    %602 = vector.broadcast %601 : vector<1x1x256xf32> to vector<1x4x256xf32>
    %603 = arith.mulf %0, %602 : vector<1x4x256xf32>
    %c0_43 = arith.constant 0 : index
    %c0_44 = arith.constant 0 : index
    %c0_45 = arith.constant 0 : index
    %604 = vector.load %arg3[%c0_43, %c0_44, %c0_45] : memref<1x4x256xf32, #tpu.memory_space<vmem>>, vector<1x4x256xf32>
    tpu.vector_store %arg3[%c0_43, %c0_44, %c0_45], %603 {strides = array<i32>} : memref<1x4x256xf32, #tpu.memory_space<vmem>>, vector<1x4x256xf32>,
    return
  }
  func.func @transform_0(%arg0: i32) -> i32 {
    %c0_i32 = arith.constant 0 : i32
    %c0_i32_0 = arith.constant 0 : i32
    return %c0_i32 : i32
  }
  func.func @transform_1(%arg0: i32) -> (i32, i32, i32) {
    %c0_i32 = arith.constant 0 : i32
    %c0_i32_0 = arith.constant 0 : i32
    %c0_i32_1 = arith.constant 0 : i32
    return %arg0, %c0_i32, %c0_i32_0 : i32, i32, i32
  }
  func.func @transform_2(%arg0: i32) -> (i32, i32, i32) {
    %c0_i32 = arith.constant 0 : i32
    %c0_i32_0 = arith.constant 0 : i32
    %c0_i32_1 = arith.constant 0 : i32
    return %arg0, %c0_i32, %c0_i32_0 : i32, i32, i32
  }
}

</mosaic_0001>

<llo_original>
// kernel: tpu_custom_call.1
$region0: #{tpu_custom_call.1}
  #allocation0 [shape = 'u32[]', space=smem, size = 0x4, offset = 0x4, fixed_abs, tag = 'smem constant byte address 0x4 - core index']
  #allocation1 [shape = 'u32[144,128]{1,0:T(1,128)}', space=vmem, size = 0x12000, scoped, tag = 'internal scratch']
  %s0 = inlined_call_operand.hbm [shape: f32[98], index: 0, kind: input, shape index: {}]
  %s1 = inlined_call_operand.hbm [shape: f32[2,4,256], index: 1, kind: input, shape index: {}]
  %s2 = inlined_call_operand.hbm [shape: f32[2,4,256], index: 2, kind: output, shape index: {}]
  %s3 = sld [smem:[#allocation0]]
  $region49: #{tpu_custom_call.1} parent=0
    _
  %s5 = ssub.s32 1, %s3
  %s6 = scalar_select 0, %s5, %s3
  $region1: #{tpu_custom_call.1} parent=0
    #allocation2 [shape = 'u8[512]{0}', space=smem, size = 0x200, scoped, tag = 'input window, operand 0, single buffered']
    #allocation3 [shape = 's32[2]{0}', space=sflag, size = 0x8, scoped, tag = 'scoped memory for tpu_custom_call.1']
    #allocation4 [shape = 's32[2]{0}', space=sflag, size = 0x8, scoped, tag = 'scoped memory for tpu_custom_call.1']
    #allocation5 [shape = 's32[2]{0}', space=sflag, size = 0x8, scoped, tag = 'scoped memory for tpu_custom_call.1']
    #allocation6 [shape = 'u8[8192]{0}', space=vmem, size = 0x2000, scoped, tag = 'input window, operand 1']
    #allocation7 [shape = 'u8[8192]{0}', space=vmem, size = 0x2000, scoped, tag = 'output window, operand 0']
    %7 = vsyncpa [#allocation5], 0
    %8 = vsyncpa [#allocation3], 0
    %s9 = scalar_lea.sflag [#allocation3], 1
    %10 = vsyncpa %s9, 0
    %11 = vsyncpa [#allocation4], 0
    %s12 = scalar_lea.sflag [#allocation4], 1
    %13 = vsyncpa %s12, 0
    loop: start=0, step=1, limit=4
    $region2: #{tpu_custom_call.1} parent=1 // loop_pre_header
      _
    $region3: #{tpu_custom_call.1} parent=1 // loop_header
      %s15 = sphi 0, %s19
      %p16 = scmp.ge.s32.totalorder %s15, 4
      %s23 = sphi 0, %s23
      %s25 = sphi 0, %s23
      %s26 = sphi 0, %s25
      %s40 = sphi 0, %s26
      %s46 = sphi 0, %s48
      %s49 = sphi 0, %s46
      %s50 = sphi 0, %s49
      %s66 = sphi 0, %s50
      %s72 = sphi 0, %s74
      %s75 = sphi 0, %s72
      %s76 = sphi 0, %s75
      %s92 = sphi 0, %s76
    $region4: #{tpu_custom_call.1} parent=1 // loop_header_branch
      %18 = sbr.rel (%p16) target = $region8
    $region5: #{tpu_custom_call.1} parent=1 // loop_body
      %s20 = ssub.s32 %s15, 1
      %s21 = ssub.s32 %s15, 2
      %s22 = sadd.s32 %s15, 1
      %s24 = sadd.s32 %s23, 1
      %p27 = scmp.eq.s32.totalorder %s15, 1
      %p28 = scmp.ne.s32.totalorder %s23, %s25
      %p29 = scmp.eq.s32.totalorder %s15, 0
      %p30 = por %p28, %p29
      %p31 = scmp.ne.s32.totalorder %s23, %s25
      %p32 = scmp.eq.s32.totalorder %s20, 1
      %p33 = por %p31, %p32
      %p34 = scmp.ne.s32.totalorder %s25, %s26
      %p35 = scmp.eq.s32.totalorder %s20, 0
      %p36 = por %p34, %p35
      %p37 = scmp.ne.s32.totalorder %s25, %s26
      %p38 = scmp.eq.s32.totalorder %s21, 1
      %p39 = por %p37, %p38
      %p41 = scmp.ne.s32.totalorder %s26, %s40
      %p42 = scmp.eq.s32.totalorder %s21, 0
      %p43 = por %p41, %p42
      %s44 = ssub.s32 %s15, %s22
      %p45 = scmp.eq.s32.totalorder %s44, 0
      %s47 = sadd.s32 %s46, 1
      %s48 = scalar_select %p45, %s46, %s47
      %p51 = pneg %p45
      %p52 = scmp.eq.s32.totalorder %s15, 1
      %p53 = por %p51, %p52
      %p54 = scmp.ne.s32.totalorder %s46, %s49
      %p55 = scmp.eq.s32.totalorder %s15, 0
      %p56 = por %p54, %p55
      %p57 = scmp.ne.s32.totalorder %s46, %s49
      %p58 = scmp.eq.s32.totalorder %s20, 1
      %p59 = por %p57, %p58
      %p60 = scmp.ne.s32.totalorder %s49, %s50
      %p61 = scmp.eq.s32.totalorder %s20, 0
      %p62 = por %p60, %p61
      %p63 = scmp.ne.s32.totalorder %s49, %s50
      %p64 = scmp.eq.s32.totalorder %s21, 1
      %p65 = por %p63, %p64
      %p67 = scmp.ne.s32.totalorder %s50, %s66
      %p68 = scmp.eq.s32.totalorder %s21, 0
      %p69 = por %p67, %p68
      %s70 = ssub.s32 %s15, %s22
      %p71 = scmp.eq.s32.totalorder %s70, 0
      %s73 = sadd.s32 %s72, 1
      %s74 = scalar_select %p71, %s72, %s73
      %p77 = pneg %p71
      %p78 = scmp.eq.s32.totalorder %s15, 1
      %p79 = por %p77, %p78
      %p80 = scmp.ne.s32.totalorder %s72, %s75
      %p81 = scmp.eq.s32.totalorder %s15, 0
      %p82 = por %p80, %p81
      %p83 = scmp.ne.s32.totalorder %s72, %s75
      %p84 = scmp.eq.s32.totalorder %s20, 1
      %p85 = por %p83, %p84
      %p86 = scmp.ne.s32.totalorder %s75, %s76
      %p87 = scmp.eq.s32.totalorder %s20, 0
      %p88 = por %p86, %p87
      %p89 = scmp.ne.s32.totalorder %s75, %s76
      %p90 = scmp.eq.s32.totalorder %s21, 1
      %p91 = por %p89, %p90
      %p93 = scmp.ne.s32.totalorder %s76, %s92
      %p94 = scmp.eq.s32.totalorder %s21, 0
      %p95 = por %p93, %p94
      %p96 = scmp.le.s32.totalorder 1, %s15
      %p97 = scmp.lt.s32.totalorder %s15, 3
      %p98 = pnand %p96, %p97
      %p99 = pneg %p98
      // Predicated region
      $region9: #{tpu_custom_call.1} parent=5 // pred_check
        _
      $region10: #{tpu_custom_call.1} parent=5 // pred_check_branch
        %101 = sbr.rel (%p98) target = $region12
      $region11: #{tpu_custom_call.1} parent=5 // pred_region
        %s102 = ssub.s32 %s15, 1
        // Predicated region
        $region13: #{tpu_custom_call.1} parent=11 // pred_check
          %p103 = pneg %p36
        $region14: #{tpu_custom_call.1} parent=11 // pred_check_branch
          %105 = sbr.rel (%p103) target = $region16
        $region15: #{tpu_custom_call.1} parent=11 // pred_region
          %s107 = ssub.s32 16, 16
          %108 = vsyncadd [#allocation5], %s107
          %111 = dma.hbm_to_smem %s0, 16, [#allocation2], [#allocation5]
        $region16: #{tpu_custom_call.1} parent=11 // pred_fallthru
          _
      $region12: #{tpu_custom_call.1} parent=5 // pred_fallthru
        _
      %p112 = scmp.lt.s32.totalorder %s15, 2
      // Predicated region
      $region17: #{tpu_custom_call.1} parent=5 // pred_check
        %p113 = pneg %p112
      $region18: #{tpu_custom_call.1} parent=5 // pred_check_branch
        %115 = sbr.rel (%p113) target = $region20
      $region19: #{tpu_custom_call.1} parent=5 // pred_region
        // Predicated region
        $region21: #{tpu_custom_call.1} parent=19 // pred_check
          %p116 = pneg %p56
        $region22: #{tpu_custom_call.1} parent=19 // pred_check_branch
          %118 = sbr.rel (%p116) target = $region24
        $region23: #{tpu_custom_call.1} parent=19 // pred_region
          %s119 = sand.u32 %s46, 1
          %s120 = scalar_lea.sflag [#allocation3], %s119
          %s121 = sand.u32 %s46, 1
          %s122 = smul.addr %s121, 8
          %s123 = scalar_lea.vmem [#allocation6], %s122
          %s125 = ssub.s32 128, 128
          %126 = vsyncadd %s120, %s125
          %s127 = smul.addr %s15, 2
          %s128 = smul.addr %s127, 64
          %s129 = scalar_lea.hbm %s1, %s128
          %s131 = sshll.u32 %s123, 4
          %s132 = int_to_ptr.vmem [resolvable:$true] %s131
          %134 = dma.hbm_to_vmem [thread:$0]  %s129, 128, %s132, %s120
        $region24: #{tpu_custom_call.1} parent=19 // pred_fallthru
          _
      $region20: #{tpu_custom_call.1} parent=5 // pred_fallthru
        _
      %p135 = scmp.le.s32.totalorder 1, %s15
      %p136 = scmp.lt.s32.totalorder %s15, 3
      %p137 = pnand %p135, %p136
      %p138 = pneg %p137
      // Predicated region
      $region25: #{tpu_custom_call.1} parent=5 // pred_check
        _
      $region26: #{tpu_custom_call.1} parent=5 // pred_check_branch
        %140 = sbr.rel (%p137) target = $region28
      $region27: #{tpu_custom_call.1} parent=5 // pred_region
        %s141 = ssub.s32 %s15, 1
        // Predicated region
        $region29: #{tpu_custom_call.1} parent=27 // pred_check
          %p142 = pneg %p36
        $region30: #{tpu_custom_call.1} parent=27 // pred_check_branch
          %144 = sbr.rel (%p142) target = $region32
        $region31: #{tpu_custom_call.1} parent=27 // pred_region
          %145 = dma.done [#allocation5], 16
        $region32: #{tpu_custom_call.1} parent=27 // pred_fallthru
          _
        %s146 = sand.u32 %s49, 1
        %s147 = scalar_lea.sflag [#allocation3], %s146
        %s148 = sand.u32 %s49, 1
        %s149 = smul.addr %s148, 8
        %s150 = scalar_lea.vmem [#allocation6], %s149
        // Predicated region
        $region33: #{tpu_custom_call.1} parent=27 // pred_check
          %p151 = pneg %p62
        $region34: #{tpu_custom_call.1} parent=27 // pred_check_branch
          %153 = sbr.rel (%p151) target = $region36
        $region35: #{tpu_custom_call.1} parent=27 // pred_region
          %154 = dma.done %s147, 128
        $region36: #{tpu_custom_call.1} parent=27 // pred_fallthru
          _
        %155 = sfence
        %p156 = pneg %p36
        %p157 = pneg %p33
        %s158 = sand.u32 %s49, 1
        %s159 = scalar_lea.sflag [#allocation3], %s158
        %s160 = sand.u32 %s49, 1
        %s161 = smul.addr %s160, 8
        %s162 = scalar_lea.vmem [#allocation6], %s161
        %p163 = pneg %p62
        %p164 = pneg %p59
        %p165 = pneg %p88
        %p166 = pneg %p85
        %s167 = sand.u32 %s75, 1
        %s168 = scalar_lea.sflag [#allocation4], %s167
        %s169 = sand.u32 %s75, 1
        %s170 = smul.addr %s169, 8
        %s171 = scalar_lea.vmem [#allocation7], %s170
        %v172 = vld [vmem:[%s150] sm:$0xff]
        %v174 = vcombine.high %v172, %v172
        %vm176 = vcmask 1043456
        %v177 = vsel %vm176, %v172, 0.0
        %v178 = vrot.slane %v177, 4
        %v179 = vadd.f32 %v177, %v178
        %v180 = vrot.slane %v179, 2
        %v181 = vadd.f32 %v179, %v180
        %v182 = vrot.slane %v181, 1
        %v183 = vadd.f32 %v181, %v182
        %v184 = vsel %vm176, %v174, 0.0
        %v185 = vrot.slane %v184, 4
        %v186 = vadd.f32 %v184, %v185
        %v187 = vrot.slane %v186, 2
        %v188 = vadd.f32 %v186, %v187
        %v189 = vrot.slane %v188, 1
        %v190 = vadd.f32 %v188, %v189
        %v191 = vrcp.pop 4.0
        %v192 = vmul.f32 %v183, %v191
        %v193 = vmul.f32 %v190, %v191
        %v194 = vsel %vm176, %v172, -inf
        %v195 = vrot.slane %v194, 4
        %v196 = vmax.f32 %v194, %v195
        %v197 = vrot.slane %v196, 2
        %v198 = vmax.f32 %v196, %v197
        %v199 = vrot.slane %v198, 1
        %v200 = vmax.f32 %v198, %v199
        %v201 = vsel %vm176, %v174, -inf
        %v202 = vrot.slane %v201, 4
        %v203 = vmax.f32 %v201, %v202
        %v204 = vrot.slane %v203, 2
        %v205 = vmax.f32 %v203, %v204
        %v206 = vrot.slane %v205, 1
        %v207 = vmax.f32 %v205, %v206
        %210 = vrot.lane.b32.xlu0 %v192, 51
        %v211 = vpop.permute.xlu0 %210
        %212 = vrot.lane.b32.xlu0 %v193, 51
        %v213 = vpop.permute.xlu0 %212
        %vm214 = vcmask 416768
        %v215 = vsel %vm214, %v211, %v213
        %v219 = vsel %vm214, 0.0, %v211
        %v220 = vsel %vm214, %v213, 0.0
        %223 = vrot.lane.b32.xlu0 %v200, 51
        %v224 = vpop.permute.xlu0 %223
        %225 = vrot.lane.b32.xlu0 %v207, 51
        %v226 = vpop.permute.xlu0 %225
        %v227 = vsel %vm214, %v224, %v226
        %v231 = vsel %vm214, 0.0, %v224
        %v232 = vsel %vm214, %v226, 0.0
        %v233 = vlaneseq
        %v234 = vand.u32 %v233, 127
        %v235 = vadd.s32 %v234, 128
        %vm236 = vcmp.lt.s32.totalorder %v234, 0
        %v237 = vsub.s32 0, %v234
        %v238 = vsel %vm236, %v237, %v234
        %v239 = vshrl.u32 %v238, 4
        %v240 = vand.u32 %v238, 15
        %v241 = vsub.s32 0, %v240
        %v242 = vsel %vm236, %v241, %v240
        %vm243 = vcmp.lt.s32.totalorder %v235, 0
        %v244 = vsub.s32 0, %v235
        %v245 = vsel %vm243, %v244, %v235
        %v246 = vshrl.u32 %v245, 4
        %v247 = vand.u32 %v245, 15
        %v248 = vsub.s32 0, %v247
        %v249 = vsel %vm243, %v248, %v247
        %vm250 = vcmp.ne.s32.totalorder %v242, 0
        %vm251 = vcmp.ne.s32.totalorder %v249, 0
        %vm252 = vcmp.lt.s32.totalorder %v242, 0
        %vm253 = vcmp.lt.s32.totalorder %v249, 0
        %vm254 = vmand %vm252, %vm250
        %vm255 = vmand %vm253, %vm251
        %v256 = vadd.s32 %v242, 16
        %v257 = vadd.s32 %v249, 16
        %v258 = vsel %vm254, %v256, %v242
        %v259 = vsel %vm255, %v257, %v249
        %s260 = sld [smem:[#allocation2]]
        %s261 = sld [smem:[#allocation2 + $0x31]]
        %v262 = vstv %s260
        %v263 = vmul.f32 %v262, %v219
        %v264 = vmul.f32 %v262, %v215
        %v265 = vadd.f32 %v263, 0.0
        %v266 = vadd.f32 %v264, 0.0
        %v267 = vstv %s261
        %v268 = vmul.f32 %v267, %v231
        %v269 = vmul.f32 %v267, %v227
        %v270 = vadd.f32 %v265, %v268
        %v271 = vadd.f32 %v266, %v269
        %s272 = sld [smem:[#allocation2 + $0x7]]
        %s273 = sld [smem:[#allocation2 + $0x38]]
        %v274 = vstv %s272
        %v275 = vmul.f32 %v274, %v219
        %v276 = vmul.f32 %v274, %v215
        %v277 = vmul.f32 %v274, %v220
        %281 = vrot.lane.b32.xlu0 %v275, 112
        %v282 = vpop.permute.xlu0 %281
        %283 = vrot.lane.b32.xlu0 %v276, 112
        %v284 = vpop.permute.xlu0 %283
        %285 = vrot.lane.b32.xlu0 %v277, 112
        %v286 = vpop.permute.xlu0 %285
        %vm287 = vcmask 916480
        %v288 = vsel %vm287, %v282, %v284
        %v289 = vsel %vm287, %v284, %v286
        %v292 = vadd.f32 %v270, %v288
        %v293 = vadd.f32 %v271, %v289
        %v294 = vstv %s273
        %v295 = vmul.f32 %v294, %v231
        %v296 = vmul.f32 %v294, %v227
        %v297 = vmul.f32 %v294, %v232
        %301 = vrot.lane.b32.xlu0 %v295, 112
        %v302 = vpop.permute.xlu0 %301
        %303 = vrot.lane.b32.xlu0 %v296, 112
        %v304 = vpop.permute.xlu0 %303
        %305 = vrot.lane.b32.xlu0 %v297, 112
        %v306 = vpop.permute.xlu0 %305
        %v307 = vsel %vm287, %v302, %v304
        %v308 = vsel %vm287, %v304, %v306
        %v311 = vadd.f32 %v292, %v307
        %v312 = vadd.f32 %v293, %v308
        %s313 = sld [smem:[#allocation2 + $0xe]]
        %s314 = sld [smem:[#allocation2 + $0x3f]]
        %v315 = vstv %s313
        %v316 = vmul.f32 %v315, %v219
        %v317 = vmul.f32 %v315, %v215
        %v318 = vmul.f32 %v315, %v220
        %322 = vrot.lane.b32.xlu0 %v316, 96
        %v323 = vpop.permute.xlu0 %322
        %324 = vrot.lane.b32.xlu0 %v317, 96
        %v325 = vpop.permute.xlu0 %324
        %326 = vrot.lane.b32.xlu0 %v318, 96
        %v327 = vpop.permute.xlu0 %326
        %vm328 = vcmask 785408
        %v329 = vsel %vm328, %v323, %v325
        %v330 = vsel %vm328, %v325, %v327
        %v333 = vadd.f32 %v311, %v329
        %v334 = vadd.f32 %v312, %v330
        %v335 = vstv %s314
        %v336 = vmul.f32 %v335, %v231
        %v337 = vmul.f32 %v335, %v227
        %v338 = vmul.f32 %v335, %v232
        %342 = vrot.lane.b32.xlu0 %v336, 96
        %v343 = vpop.permute.xlu0 %342
        %344 = vrot.lane.b32.xlu0 %v337, 96
        %v345 = vpop.permute.xlu0 %344
        %346 = vrot.lane.b32.xlu0 %v338, 96
        %v347 = vpop.permute.xlu0 %346
        %v348 = vsel %vm328, %v343, %v345
        %v349 = vsel %vm328, %v345, %v347
        %v352 = vadd.f32 %v333, %v348
        %v353 = vadd.f32 %v334, %v349
        %s354 = sld [smem:[#allocation2 + $0x15]]
        %s355 = sld [smem:[#allocation2 + $0x46]]
        %v356 = vstv %s354
        %v357 = vmul.f32 %v356, %v219
        %v358 = vmul.f32 %v356, %v215
        %v359 = vmul.f32 %v356, %v220
        %363 = vrot.lane.b32.xlu0 %v357, 80
        %v364 = vpop.permute.xlu0 %363
        %365 = vrot.lane.b32.xlu0 %v358, 80
        %v366 = vpop.permute.xlu0 %365
        %367 = vrot.lane.b32.xlu0 %v359, 80
        %v368 = vpop.permute.xlu0 %367
        %vm369 = vcmask 654336
        %v370 = vsel %vm369, %v364, %v366
        %v371 = vsel %vm369, %v366, %v368
        %v374 = vadd.f32 %v352, %v370
        %v375 = vadd.f32 %v353, %v371
        %v376 = vstv %s355
        %v377 = vmul.f32 %v376, %v231
        %v378 = vmul.f32 %v376, %v227
        %v379 = vmul.f32 %v376, %v232
        %383 = vrot.lane.b32.xlu0 %v377, 80
        %v384 = vpop.permute.xlu0 %383
        %385 = vrot.lane.b32.xlu0 %v378, 80
        %v386 = vpop.permute.xlu0 %385
        %387 = vrot.lane.b32.xlu0 %v379, 80
        %v388 = vpop.permute.xlu0 %387
        %v389 = vsel %vm369, %v384, %v386
        %v390 = vsel %vm369, %v386, %v388
        %v393 = vadd.f32 %v374, %v389
        %v394 = vadd.f32 %v375, %v390
        %s395 = sld [smem:[#allocation2 + $0x1c]]
        %s396 = sld [smem:[#allocation2 + $0x4d]]
        %v397 = vstv %s395
        %v398 = vmul.f32 %v397, %v219
        %v399 = vmul.f32 %v397, %v215
        %v400 = vmul.f32 %v397, %v220
        %404 = vrot.lane.b32.xlu0 %v398, 64
        %v405 = vpop.permute.xlu0 %404
        %406 = vrot.lane.b32.xlu0 %v399, 64
        %v407 = vpop.permute.xlu0 %406
        %408 = vrot.lane.b32.xlu0 %v400, 64
        %v409 = vpop.permute.xlu0 %408
        %vm410 = vcmask 523264
        %v411 = vsel %vm410, %v405, %v407
        %v412 = vsel %vm410, %v407, %v409
        %v415 = vadd.f32 %v393, %v411
        %v416 = vadd.f32 %v394, %v412
        %v417 = vstv %s396
        %v418 = vmul.f32 %v417, %v231
        %v419 = vmul.f32 %v417, %v227
        %v420 = vmul.f32 %v417, %v232
        %424 = vrot.lane.b32.xlu0 %v418, 64
        %v425 = vpop.permute.xlu0 %424
        %426 = vrot.lane.b32.xlu0 %v419, 64
        %v427 = vpop.permute.xlu0 %426
        %428 = vrot.lane.b32.xlu0 %v420, 64
        %v429 = vpop.permute.xlu0 %428
        %v430 = vsel %vm410, %v425, %v427
        %v431 = vsel %vm410, %v427, %v429
        %v434 = vadd.f32 %v415, %v430
        %v435 = vadd.f32 %v416, %v431
        %s436 = sld [smem:[#allocation2 + $0x23]]
        %s437 = sld [smem:[#allocation2 + $0x54]]
        %v438 = vstv %s436
        %v439 = vmul.f32 %v438, %v219
        %v440 = vmul.f32 %v438, %v215
        %v441 = vmul.f32 %v438, %v220
        %445 = vrot.lane.b32.xlu0 %v439, 48
        %v446 = vpop.permute.xlu0 %445
        %447 = vrot.lane.b32.xlu0 %v440, 48
        %v448 = vpop.permute.xlu0 %447
        %449 = vrot.lane.b32.xlu0 %v441, 48
        %v450 = vpop.permute.xlu0 %449
        %vm451 = vcmask 392192
        %v452 = vsel %vm451, %v446, %v448
        %v453 = vsel %vm451, %v448, %v450
        %v456 = vadd.f32 %v434, %v452
        %v457 = vadd.f32 %v435, %v453
        %v458 = vstv %s437
        %v459 = vmul.f32 %v458, %v231
        %v460 = vmul.f32 %v458, %v227
        %v461 = vmul.f32 %v458, %v232
        %465 = vrot.lane.b32.xlu0 %v459, 48
        %v466 = vpop.permute.xlu0 %465
        %467 = vrot.lane.b32.xlu0 %v460, 48
        %v468 = vpop.permute.xlu0 %467
        %469 = vrot.lane.b32.xlu0 %v461, 48
        %v470 = vpop.permute.xlu0 %469
        %v471 = vsel %vm451, %v466, %v468
        %v472 = vsel %vm451, %v468, %v470
        %v475 = vadd.f32 %v456, %v471
        %v476 = vadd.f32 %v457, %v472
        %s477 = sld [smem:[#allocation2 + $0x2a]]
        %s478 = sld [smem:[#allocation2 + $0x5b]]
        %v479 = vstv %s477
        %v480 = vmul.f32 %v479, %v219
        %v481 = vmul.f32 %v479, %v215
        %v482 = vmul.f32 %v479, %v220
        %486 = vrot.lane.b32.xlu0 %v480, 32
        %v487 = vpop.permute.xlu0 %486
        %488 = vrot.lane.b32.xlu0 %v481, 32
        %v489 = vpop.permute.xlu0 %488
        %490 = vrot.lane.b32.xlu0 %v482, 32
        %v491 = vpop.permute.xlu0 %490
        %vm492 = vcmask 261120
        %v493 = vsel %vm492, %v487, %v489
        %v494 = vsel %vm492, %v489, %v491
        %v497 = vadd.f32 %v475, %v493
        %v498 = vadd.f32 %v476, %v494
        %v499 = vstv %s478
        %v500 = vmul.f32 %v499, %v231
        %v501 = vmul.f32 %v499, %v227
        %v502 = vmul.f32 %v499, %v232
        %506 = vrot.lane.b32.xlu0 %v500, 32
        %v507 = vpop.permute.xlu0 %506
        %508 = vrot.lane.b32.xlu0 %v501, 32
        %v509 = vpop.permute.xlu0 %508
        %510 = vrot.lane.b32.xlu0 %v502, 32
        %v511 = vpop.permute.xlu0 %510
        %v512 = vsel %vm492, %v507, %v509
        %v513 = vsel %vm492, %v509, %v511
        %v516 = vadd.f32 %v497, %v512
        %v517 = vadd.f32 %v498, %v513
        %v518 = vadd.s32 %v258, 4294967293
        %v519 = vadd.s32 %v259, 4294967293
        %vm520 = vcmp.ge.s32.totalorder %v518, 0
        %vm521 = vcmp.ge.s32.totalorder %v519, 0
        %vm522 = vcmp.lt.s32.totalorder %v518, 16
        %vm523 = vcmp.lt.s32.totalorder %v519, 16
        %vm524 = vmand %vm520, %vm522
        %vm525 = vmand %vm521, %vm523
        %v526 = vsel %vm524, %v516, 0.0
        %v527 = vsel %vm525, %v517, 0.0
        %v528 = vadd.f32 %v526, 0.0
        %v529 = vadd.f32 %v527, 0.0
        %s530 = sld [smem:[#allocation2 + $0x1]]
        %s531 = sld [smem:[#allocation2 + $0x32]]
        %v532 = vstv %s530
        %v533 = vmul.f32 %v532, %v219
        %v534 = vmul.f32 %v532, %v215
        %v535 = vmul.f32 %v532, %v220
        %v536 = vadd.f32 %v533, 0.0
        %v537 = vadd.f32 %v534, 0.0
        %v538 = vadd.f32 %v535, 0.0
        %v539 = vstv %s531
        %v540 = vmul.f32 %v539, %v231
        %v541 = vmul.f32 %v539, %v227
        %v542 = vmul.f32 %v539, %v232
        %v543 = vadd.f32 %v536, %v540
        %v544 = vadd.f32 %v537, %v541
        %v545 = vadd.f32 %v538, %v542
        %s546 = sld [smem:[#allocation2 + $0x8]]
        %s547 = sld [smem:[#allocation2 + $0x39]]
        %v548 = vstv %s546
        %v549 = vmul.f32 %v548, %v219
        %v550 = vmul.f32 %v548, %v215
        %v551 = vmul.f32 %v548, %v220
        %555 = vrot.lane.b32.xlu0 %v549, 112
        %v556 = vpop.permute.xlu0 %555
        %557 = vrot.lane.b32.xlu0 %v550, 112
        %v558 = vpop.permute.xlu0 %557
        %559 = vrot.lane.b32.xlu0 %v551, 112
        %v560 = vpop.permute.xlu0 %559
        %v561 = vsel %vm287, %v556, %v558
        %v562 = vsel %vm287, %v558, %v560
        %v566 = vadd.f32 %v543, %v561
        %v567 = vadd.f32 %v544, %v562
        %v568 = vadd.f32 %v545, %v560
        %v569 = vstv %s547
        %v570 = vmul.f32 %v569, %v231
        %v571 = vmul.f32 %v569, %v227
        %v572 = vmul.f32 %v569, %v232
        %576 = vrot.lane.b32.xlu0 %v570, 112
        %v577 = vpop.permute.xlu0 %576
        %578 = vrot.lane.b32.xlu0 %v571, 112
        %v579 = vpop.permute.xlu0 %578
        %580 = vrot.lane.b32.xlu0 %v572, 112
        %v581 = vpop.permute.xlu0 %580
        %v582 = vsel %vm287, %v577, %v579
        %v583 = vsel %vm287, %v579, %v581
        %v587 = vadd.f32 %v566, %v582
        %v588 = vadd.f32 %v567, %v583
        %v589 = vadd.f32 %v568, %v581
        %s590 = sld [smem:[#allocation2 + $0xf]]
        %s591 = sld [smem:[#allocation2 + $0x40]]
        %v592 = vstv %s590
        %v593 = vmul.f32 %v592, %v219
        %v594 = vmul.f32 %v592, %v215
        %v595 = vmul.f32 %v592, %v220
        %599 = vrot.lane.b32.xlu0 %v593, 96
        %v600 = vpop.permute.xlu0 %599
        %601 = vrot.lane.b32.xlu0 %v594, 96
        %v602 = vpop.permute.xlu0 %601
        %603 = vrot.lane.b32.xlu0 %v595, 96
        %v604 = vpop.permute.xlu0 %603
        %v605 = vsel %vm328, %v600, %v602
        %v606 = vsel %vm328, %v602, %v604
        %v610 = vadd.f32 %v587, %v605
        %v611 = vadd.f32 %v588, %v606
        %v612 = vadd.f32 %v589, %v604
        %v613 = vstv %s591
        %v614 = vmul.f32 %v613, %v231
        %v615 = vmul.f32 %v613, %v227
        %v616 = vmul.f32 %v613, %v232
        %620 = vrot.lane.b32.xlu0 %v614, 96
        %v621 = vpop.permute.xlu0 %620
        %622 = vrot.lane.b32.xlu0 %v615, 96
        %v623 = vpop.permute.xlu0 %622
        %624 = vrot.lane.b32.xlu0 %v616, 96
        %v625 = vpop.permute.xlu0 %624
        %v626 = vsel %vm328, %v621, %v623
        %v627 = vsel %vm328, %v623, %v625
        %v631 = vadd.f32 %v610, %v626
        %v632 = vadd.f32 %v611, %v627
        %v633 = vadd.f32 %v612, %v625
        %s634 = sld [smem:[#allocation2 + $0x16]]
        %s635 = sld [smem:[#allocation2 + $0x47]]
        %v636 = vstv %s634
        %v637 = vmul.f32 %v636, %v219
        %v638 = vmul.f32 %v636, %v215
        %v639 = vmul.f32 %v636, %v220
        %643 = vrot.lane.b32.xlu0 %v637, 80
        %v644 = vpop.permute.xlu0 %643
        %645 = vrot.lane.b32.xlu0 %v638, 80
        %v646 = vpop.permute.xlu0 %645
        %647 = vrot.lane.b32.xlu0 %v639, 80
        %v648 = vpop.permute.xlu0 %647
        %v649 = vsel %vm369, %v644, %v646
        %v650 = vsel %vm369, %v646, %v648
        %v654 = vadd.f32 %v631, %v649
        %v655 = vadd.f32 %v632, %v650
        %v656 = vadd.f32 %v633, %v648
        %v657 = vstv %s635
        %v658 = vmul.f32 %v657, %v231
        %v659 = vmul.f32 %v657, %v227
        %v660 = vmul.f32 %v657, %v232
        %664 = vrot.lane.b32.xlu0 %v658, 80
        %v665 = vpop.permute.xlu0 %664
        %666 = vrot.lane.b32.xlu0 %v659, 80
        %v667 = vpop.permute.xlu0 %666
        %668 = vrot.lane.b32.xlu0 %v660, 80
        %v669 = vpop.permute.xlu0 %668
        %v670 = vsel %vm369, %v665, %v667
        %v671 = vsel %vm369, %v667, %v669
        %v675 = vadd.f32 %v654, %v670
        %v676 = vadd.f32 %v655, %v671
        %v677 = vadd.f32 %v656, %v669
        %s678 = sld [smem:[#allocation2 + $0x1d]]
        %s679 = sld [smem:[#allocation2 + $0x4e]]
        %v680 = vstv %s678
        %v681 = vmul.f32 %v680, %v219
        %v682 = vmul.f32 %v680, %v215
        %v683 = vmul.f32 %v680, %v220
        %687 = vrot.lane.b32.xlu0 %v681, 64
        %v688 = vpop.permute.xlu0 %687
        %689 = vrot.lane.b32.xlu0 %v682, 64
        %v690 = vpop.permute.xlu0 %689
        %691 = vrot.lane.b32.xlu0 %v683, 64
        %v692 = vpop.permute.xlu0 %691
        %v693 = vsel %vm410, %v688, %v690
        %v694 = vsel %vm410, %v690, %v692
        %v698 = vadd.f32 %v675, %v693
        %v699 = vadd.f32 %v676, %v694
        %v700 = vadd.f32 %v677, %v692
        %v701 = vstv %s679
        %v702 = vmul.f32 %v701, %v231
        %v703 = vmul.f32 %v701, %v227
        %v704 = vmul.f32 %v701, %v232
        %708 = vrot.lane.b32.xlu0 %v702, 64
        %v709 = vpop.permute.xlu0 %708
        %710 = vrot.lane.b32.xlu0 %v703, 64
        %v711 = vpop.permute.xlu0 %710
        %712 = vrot.lane.b32.xlu0 %v704, 64
        %v713 = vpop.permute.xlu0 %712
        %v714 = vsel %vm410, %v709, %v711
        %v715 = vsel %vm410, %v711, %v713
        %v719 = vadd.f32 %v698, %v714
        %v720 = vadd.f32 %v699, %v715
        %v721 = vadd.f32 %v700, %v713
        %s722 = sld [smem:[#allocation2 + $0x24]]
        %s723 = sld [smem:[#allocation2 + $0x55]]
        %v724 = vstv %s722
        %v725 = vmul.f32 %v724, %v219
        %v726 = vmul.f32 %v724, %v215
        %v727 = vmul.f32 %v724, %v220
        %731 = vrot.lane.b32.xlu0 %v725, 48
        %v732 = vpop.permute.xlu0 %731
        %733 = vrot.lane.b32.xlu0 %v726, 48
        %v734 = vpop.permute.xlu0 %733
        %735 = vrot.lane.b32.xlu0 %v727, 48
        %v736 = vpop.permute.xlu0 %735
        %v737 = vsel %vm451, %v732, %v734
        %v738 = vsel %vm451, %v734, %v736
        %v742 = vadd.f32 %v719, %v737
        %v743 = vadd.f32 %v720, %v738
        %v744 = vadd.f32 %v721, %v736
        %v745 = vstv %s723
        %v746 = vmul.f32 %v745, %v231
        %v747 = vmul.f32 %v745, %v227
        %v748 = vmul.f32 %v745, %v232
        %752 = vrot.lane.b32.xlu0 %v746, 48
        %v753 = vpop.permute.xlu0 %752
        %754 = vrot.lane.b32.xlu0 %v747, 48
        %v755 = vpop.permute.xlu0 %754
        %756 = vrot.lane.b32.xlu0 %v748, 48
        %v757 = vpop.permute.xlu0 %756
        %v758 = vsel %vm451, %v753, %v755
        %v759 = vsel %vm451, %v755, %v757
        %v763 = vadd.f32 %v742, %v758
        %v764 = vadd.f32 %v743, %v759
        %v765 = vadd.f32 %v744, %v757
        %s766 = sld [smem:[#allocation2 + $0x2b]]
        %s767 = sld [smem:[#allocation2 + $0x5c]]
        %v768 = vstv %s766
        %v769 = vmul.f32 %v768, %v219
        %v770 = vmul.f32 %v768, %v215
        %v771 = vmul.f32 %v768, %v220
        %775 = vrot.lane.b32.xlu0 %v769, 32
        %v776 = vpop.permute.xlu0 %775
        %777 = vrot.lane.b32.xlu0 %v770, 32
        %v778 = vpop.permute.xlu0 %777
        %779 = vrot.lane.b32.xlu0 %v771, 32
        %v780 = vpop.permute.xlu0 %779
        %v781 = vsel %vm492, %v776, %v778
        %v782 = vsel %vm492, %v778, %v780
        %v786 = vadd.f32 %v763, %v781
        %v787 = vadd.f32 %v764, %v782
        %v788 = vadd.f32 %v765, %v780
        %v789 = vstv %s767
        %v790 = vmul.f32 %v789, %v231
        %v791 = vmul.f32 %v789, %v227
        %v792 = vmul.f32 %v789, %v232
        %796 = vrot.lane.b32.xlu0 %v790, 32
        %v797 = vpop.permute.xlu0 %796
        %798 = vrot.lane.b32.xlu0 %v791, 32
        %v799 = vpop.permute.xlu0 %798
        %800 = vrot.lane.b32.xlu0 %v792, 32
        %v801 = vpop.permute.xlu0 %800
        %v802 = vsel %vm492, %v797, %v799
        %v803 = vsel %vm492, %v799, %v801
        %v807 = vadd.f32 %v786, %v802
        %v808 = vadd.f32 %v787, %v803
        %v809 = vadd.f32 %v788, %v801
        %v810 = vadd.s32 %v258, 4294967294
        %v811 = vadd.s32 %v259, 4294967294
        %vm812 = vcmp.ge.s32.totalorder %v810, 0
        %vm813 = vcmp.ge.s32.totalorder %v811, 0
        %vm814 = vcmp.lt.s32.totalorder %v810, 16
        %vm815 = vcmp.lt.s32.totalorder %v811, 16
        %vm816 = vmand %vm812, %vm814
        %vm817 = vmand %vm813, %vm815
        %821 = vrot.lane.b32.xlu0 %v807, 127
        %v822 = vpop.permute.xlu0 %821
        %823 = vrot.lane.b32.xlu0 %v808, 127
        %v824 = vpop.permute.xlu0 %823
        %825 = vrot.lane.b32.xlu0 %v809, 127
        %v826 = vpop.permute.xlu0 %825
        %vm827 = vcmask 1039360
        %v828 = vsel %vm827, %v822, %v824
        %v829 = vsel %vm827, %v824, %v826
        %v832 = vsel %vm816, %v828, 0.0
        %v833 = vsel %vm817, %v829, 0.0
        %v834 = vadd.f32 %v528, %v832
        %v835 = vadd.f32 %v529, %v833
        %s836 = sld [smem:[#allocation2 + $0x2]]
        %s837 = sld [smem:[#allocation2 + $0x33]]
        %v838 = vstv %s836
        %v839 = vmul.f32 %v838, %v219
        %v840 = vmul.f32 %v838, %v215
        %v841 = vmul.f32 %v838, %v220
        %v842 = vadd.f32 %v839, 0.0
        %v843 = vadd.f32 %v840, 0.0
        %v844 = vadd.f32 %v841, 0.0
        %v845 = vstv %s837
        %v846 = vmul.f32 %v845, %v231
        %v847 = vmul.f32 %v845, %v227
        %v848 = vmul.f32 %v845, %v232
        %v849 = vadd.f32 %v842, %v846
        %v850 = vadd.f32 %v843, %v847
        %v851 = vadd.f32 %v844, %v848
        %s852 = sld [smem:[#allocation2 + $0x9]]
        %s853 = sld [smem:[#allocation2 + $0x3a]]
        %v854 = vstv %s852
        %v855 = vmul.f32 %v854, %v219
        %v856 = vmul.f32 %v854, %v215
        %v857 = vmul.f32 %v854, %v220
        %861 = vrot.lane.b32.xlu0 %v855, 112
        %v862 = vpop.permute.xlu0 %861
        %863 = vrot.lane.b32.xlu0 %v856, 112
        %v864 = vpop.permute.xlu0 %863
        %865 = vrot.lane.b32.xlu0 %v857, 112
        %v866 = vpop.permute.xlu0 %865
        %v867 = vsel %vm287, %v862, %v864
        %v868 = vsel %vm287, %v864, %v866
        %v872 = vadd.f32 %v849, %v867
        %v873 = vadd.f32 %v850, %v868
        %v874 = vadd.f32 %v851, %v866
        %v875 = vstv %s853
        %v876 = vmul.f32 %v875, %v231
        %v877 = vmul.f32 %v875, %v227
        %v878 = vmul.f32 %v875, %v232
        %882 = vrot.lane.b32.xlu0 %v876, 112
        %v883 = vpop.permute.xlu0 %882
        %884 = vrot.lane.b32.xlu0 %v877, 112
        %v885 = vpop.permute.xlu0 %884
        %886 = vrot.lane.b32.xlu0 %v878, 112
        %v887 = vpop.permute.xlu0 %886
        %v888 = vsel %vm287, %v883, %v885
        %v889 = vsel %vm287, %v885, %v887
        %v893 = vadd.f32 %v872, %v888
        %v894 = vadd.f32 %v873, %v889
        %v895 = vadd.f32 %v874, %v887
        %s896 = sld [smem:[#allocation2 + $0x10]]
        %s897 = sld [smem:[#allocation2 + $0x41]]
        %v898 = vstv %s896
        %v899 = vmul.f32 %v898, %v219
        %v900 = vmul.f32 %v898, %v215
        %v901 = vmul.f32 %v898, %v220
        %905 = vrot.lane.b32.xlu0 %v899, 96
        %v906 = vpop.permute.xlu0 %905
        %907 = vrot.lane.b32.xlu0 %v900, 96
        %v908 = vpop.permute.xlu0 %907
        %909 = vrot.lane.b32.xlu0 %v901, 96
        %v910 = vpop.permute.xlu0 %909
        %v911 = vsel %vm328, %v906, %v908
        %v912 = vsel %vm328, %v908, %v910
        %v916 = vadd.f32 %v893, %v911
        %v917 = vadd.f32 %v894, %v912
        %v918 = vadd.f32 %v895, %v910
        %v919 = vstv %s897
        %v920 = vmul.f32 %v919, %v231
        %v921 = vmul.f32 %v919, %v227
        %v922 = vmul.f32 %v919, %v232
        %926 = vrot.lane.b32.xlu0 %v920, 96
        %v927 = vpop.permute.xlu0 %926
        %928 = vrot.lane.b32.xlu0 %v921, 96
        %v929 = vpop.permute.xlu0 %928
        %930 = vrot.lane.b32.xlu0 %v922, 96
        %v931 = vpop.permute.xlu0 %930
        %v932 = vsel %vm328, %v927, %v929
        %v933 = vsel %vm328, %v929, %v931
        %v937 = vadd.f32 %v916, %v932
        %v938 = vadd.f32 %v917, %v933
        %v939 = vadd.f32 %v918, %v931
        %s940 = sld [smem:[#allocation2 + $0x17]]
        %s941 = sld [smem:[#allocation2 + $0x48]]
        %v942 = vstv %s940
        %v943 = vmul.f32 %v942, %v219
        %v944 = vmul.f32 %v942, %v215
        %v945 = vmul.f32 %v942, %v220
        %949 = vrot.lane.b32.xlu0 %v943, 80
        %v950 = vpop.permute.xlu0 %949
        %951 = vrot.lane.b32.xlu0 %v944, 80
        %v952 = vpop.permute.xlu0 %951
        %953 = vrot.lane.b32.xlu0 %v945, 80
        %v954 = vpop.permute.xlu0 %953
        %v955 = vsel %vm369, %v950, %v952
        %v956 = vsel %vm369, %v952, %v954
        %v960 = vadd.f32 %v937, %v955
        %v961 = vadd.f32 %v938, %v956
        %v962 = vadd.f32 %v939, %v954
        %v963 = vstv %s941
        %v964 = vmul.f32 %v963, %v231
        %v965 = vmul.f32 %v963, %v227
        %v966 = vmul.f32 %v963, %v232
        %970 = vrot.lane.b32.xlu0 %v964, 80
        %v971 = vpop.permute.xlu0 %970
        %972 = vrot.lane.b32.xlu0 %v965, 80
        %v973 = vpop.permute.xlu0 %972
        %974 = vrot.lane.b32.xlu0 %v966, 80
        %v975 = vpop.permute.xlu0 %974
        %v976 = vsel %vm369, %v971, %v973
        %v977 = vsel %vm369, %v973, %v975
        %v981 = vadd.f32 %v960, %v976
        %v982 = vadd.f32 %v961, %v977
        %v983 = vadd.f32 %v962, %v975
        %s984 = sld [smem:[#allocation2 + $0x1e]]
        %s985 = sld [smem:[#allocation2 + $0x4f]]
        %v986 = vstv %s984
        %v987 = vmul.f32 %v986, %v219
        %v988 = vmul.f32 %v986, %v215
        %v989 = vmul.f32 %v986, %v220
        %993 = vrot.lane.b32.xlu0 %v987, 64
        %v994 = vpop.permute.xlu0 %993
        %995 = vrot.lane.b32.xlu0 %v988, 64
        %v996 = vpop.permute.xlu0 %995
        %997 = vrot.lane.b32.xlu0 %v989, 64
        %v998 = vpop.permute.xlu0 %997
        %v999 = vsel %vm410, %v994, %v996
        %v1000 = vsel %vm410, %v996, %v998
        %v1004 = vadd.f32 %v981, %v999
        %v1005 = vadd.f32 %v982, %v1000
        %v1006 = vadd.f32 %v983, %v998
        %v1007 = vstv %s985
        %v1008 = vmul.f32 %v1007, %v231
        %v1009 = vmul.f32 %v1007, %v227
        %v1010 = vmul.f32 %v1007, %v232
        %1014 = vrot.lane.b32.xlu0 %v1008, 64
        %v1015 = vpop.permute.xlu0 %1014
        %1016 = vrot.lane.b32.xlu0 %v1009, 64
        %v1017 = vpop.permute.xlu0 %1016
        %1018 = vrot.lane.b32.xlu0 %v1010, 64
        %v1019 = vpop.permute.xlu0 %1018
        %v1020 = vsel %vm410, %v1015, %v1017
        %v1021 = vsel %vm410, %v1017, %v1019
        %v1025 = vadd.f32 %v1004, %v1020
        %v1026 = vadd.f32 %v1005, %v1021
        %v1027 = vadd.f32 %v1006, %v1019
        %s1028 = sld [smem:[#allocation2 + $0x25]]
        %s1029 = sld [smem:[#allocation2 + $0x56]]
        %v1030 = vstv %s1028
        %v1031 = vmul.f32 %v1030, %v219
        %v1032 = vmul.f32 %v1030, %v215
        %v1033 = vmul.f32 %v1030, %v220
        %1037 = vrot.lane.b32.xlu0 %v1031, 48
        %v1038 = vpop.permute.xlu0 %1037
        %1039 = vrot.lane.b32.xlu0 %v1032, 48
        %v1040 = vpop.permute.xlu0 %1039
        %1041 = vrot.lane.b32.xlu0 %v1033, 48
        %v1042 = vpop.permute.xlu0 %1041
        %v1043 = vsel %vm451, %v1038, %v1040
        %v1044 = vsel %vm451, %v1040, %v1042
        %v1048 = vadd.f32 %v1025, %v1043
        %v1049 = vadd.f32 %v1026, %v1044
        %v1050 = vadd.f32 %v1027, %v1042
        %v1051 = vstv %s1029
        %v1052 = vmul.f32 %v1051, %v231
        %v1053 = vmul.f32 %v1051, %v227
        %v1054 = vmul.f32 %v1051, %v232
        %1058 = vrot.lane.b32.xlu0 %v1052, 48
        %v1059 = vpop.permute.xlu0 %1058
        %1060 = vrot.lane.b32.xlu0 %v1053, 48
        %v1061 = vpop.permute.xlu0 %1060
        %1062 = vrot.lane.b32.xlu0 %v1054, 48
        %v1063 = vpop.permute.xlu0 %1062
        %v1064 = vsel %vm451, %v1059, %v1061
        %v1065 = vsel %vm451, %v1061, %v1063
        %v1069 = vadd.f32 %v1048, %v1064
        %v1070 = vadd.f32 %v1049, %v1065
        %v1071 = vadd.f32 %v1050, %v1063
        %s1072 = sld [smem:[#allocation2 + $0x2c]]
        %s1073 = sld [smem:[#allocation2 + $0x5d]]
        %v1074 = vstv %s1072
        %v1075 = vmul.f32 %v1074, %v219
        %v1076 = vmul.f32 %v1074, %v215
        %v1077 = vmul.f32 %v1074, %v220
        %1081 = vrot.lane.b32.xlu0 %v1075, 32
        %v1082 = vpop.permute.xlu0 %1081
        %1083 = vrot.lane.b32.xlu0 %v1076, 32
        %v1084 = vpop.permute.xlu0 %1083
        %1085 = vrot.lane.b32.xlu0 %v1077, 32
        %v1086 = vpop.permute.xlu0 %1085
        %v1087 = vsel %vm492, %v1082, %v1084
        %v1088 = vsel %vm492, %v1084, %v1086
        %v1092 = vadd.f32 %v1069, %v1087
        %v1093 = vadd.f32 %v1070, %v1088
        %v1094 = vadd.f32 %v1071, %v1086
        %v1095 = vstv %s1073
        %v1096 = vmul.f32 %v1095, %v231
        %v1097 = vmul.f32 %v1095, %v227
        %v1098 = vmul.f32 %v1095, %v232
        %1102 = vrot.lane.b32.xlu0 %v1096, 32
        %v1103 = vpop.permute.xlu0 %1102
        %1104 = vrot.lane.b32.xlu0 %v1097, 32
        %v1105 = vpop.permute.xlu0 %1104
        %1106 = vrot.lane.b32.xlu0 %v1098, 32
        %v1107 = vpop.permute.xlu0 %1106
        %v1108 = vsel %vm492, %v1103, %v1105
        %v1109 = vsel %vm492, %v1105, %v1107
        %v1113 = vadd.f32 %v1092, %v1108
        %v1114 = vadd.f32 %v1093, %v1109
        %v1115 = vadd.f32 %v1094, %v1107
        %v1116 = vadd.s32 %v258, 4294967295
        %v1117 = vadd.s32 %v259, 4294967295
        %vm1118 = vcmp.ge.s32.totalorder %v1116, 0
        %vm1119 = vcmp.ge.s32.totalorder %v1117, 0
        %vm1120 = vcmp.lt.s32.totalorder %v1116, 16
        %vm1121 = vcmp.lt.s32.totalorder %v1117, 16
        %vm1122 = vmand %vm1118, %vm1120
        %vm1123 = vmand %vm1119, %vm1121
        %1127 = vrot.lane.b32.xlu0 %v1113, 126
        %v1128 = vpop.permute.xlu0 %1127
        %1129 = vrot.lane.b32.xlu0 %v1114, 126
        %v1130 = vpop.permute.xlu0 %1129
        %1131 = vrot.lane.b32.xlu0 %v1115, 126
        %v1132 = vpop.permute.xlu0 %1131
        %vm1133 = vcmask 1031168
        %v1134 = vsel %vm1133, %v1128, %v1130
        %v1135 = vsel %vm1133, %v1130, %v1132
        %v1138 = vsel %vm1122, %v1134, 0.0
        %v1139 = vsel %vm1123, %v1135, 0.0
        %v1140 = vadd.f32 %v834, %v1138
        %v1141 = vadd.f32 %v835, %v1139
        %s1142 = sld [smem:[#allocation2 + $0x3]]
        %s1143 = sld [smem:[#allocation2 + $0x34]]
        %v1144 = vstv %s1142
        %v1145 = vmul.f32 %v1144, %v219
        %v1146 = vmul.f32 %v1144, %v215
        %v1147 = vmul.f32 %v1144, %v220
        %v1148 = vadd.f32 %v1145, 0.0
        %v1149 = vadd.f32 %v1146, 0.0
        %v1150 = vadd.f32 %v1147, 0.0
        %v1151 = vstv %s1143
        %v1152 = vmul.f32 %v1151, %v231
        %v1153 = vmul.f32 %v1151, %v227
        %v1154 = vmul.f32 %v1151, %v232
        %v1155 = vadd.f32 %v1148, %v1152
        %v1156 = vadd.f32 %v1149, %v1153
        %v1157 = vadd.f32 %v1150, %v1154
        %s1158 = sld [smem:[#allocation2 + $0xa]]
        %s1159 = sld [smem:[#allocation2 + $0x3b]]
        %v1160 = vstv %s1158
        %v1161 = vmul.f32 %v1160, %v219
        %v1162 = vmul.f32 %v1160, %v215
        %v1163 = vmul.f32 %v1160, %v220
        %1167 = vrot.lane.b32.xlu0 %v1161, 112
        %v1168 = vpop.permute.xlu0 %1167
        %1169 = vrot.lane.b32.xlu0 %v1162, 112
        %v1170 = vpop.permute.xlu0 %1169
        %1171 = vrot.lane.b32.xlu0 %v1163, 112
        %v1172 = vpop.permute.xlu0 %1171
        %v1173 = vsel %vm287, %v1168, %v1170
        %v1174 = vsel %vm287, %v1170, %v1172
        %v1178 = vadd.f32 %v1155, %v1173
        %v1179 = vadd.f32 %v1156, %v1174
        %v1180 = vadd.f32 %v1157, %v1172
        %v1181 = vstv %s1159
        %v1182 = vmul.f32 %v1181, %v231
        %v1183 = vmul.f32 %v1181, %v227
        %v1184 = vmul.f32 %v1181, %v232
        %1188 = vrot.lane.b32.xlu0 %v1182, 112
        %v1189 = vpop.permute.xlu0 %1188
        %1190 = vrot.lane.b32.xlu0 %v1183, 112
        %v1191 = vpop.permute.xlu0 %1190
        %1192 = vrot.lane.b32.xlu0 %v1184, 112
        %v1193 = vpop.permute.xlu0 %1192
        %v1194 = vsel %vm287, %v1189, %v1191
        %v1195 = vsel %vm287, %v1191, %v1193
        %v1199 = vadd.f32 %v1178, %v1194
        %v1200 = vadd.f32 %v1179, %v1195
        %v1201 = vadd.f32 %v1180, %v1193
        %s1202 = sld [smem:[#allocation2 + $0x11]]
        %s1203 = sld [smem:[#allocation2 + $0x42]]
        %v1204 = vstv %s1202
        %v1205 = vmul.f32 %v1204, %v219
        %v1206 = vmul.f32 %v1204, %v215
        %v1207 = vmul.f32 %v1204, %v220
        %1211 = vrot.lane.b32.xlu0 %v1205, 96
        %v1212 = vpop.permute.xlu0 %1211
        %1213 = vrot.lane.b32.xlu0 %v1206, 96
        %v1214 = vpop.permute.xlu0 %1213
        %1215 = vrot.lane.b32.xlu0 %v1207, 96
        %v1216 = vpop.permute.xlu0 %1215
        %v1217 = vsel %vm328, %v1212, %v1214
        %v1218 = vsel %vm328, %v1214, %v1216
        %v1222 = vadd.f32 %v1199, %v1217
        %v1223 = vadd.f32 %v1200, %v1218
        %v1224 = vadd.f32 %v1201, %v1216
        %v1225 = vstv %s1203
        %v1226 = vmul.f32 %v1225, %v231
        %v1227 = vmul.f32 %v1225, %v227
        %v1228 = vmul.f32 %v1225, %v232
        %1232 = vrot.lane.b32.xlu0 %v1226, 96
        %v1233 = vpop.permute.xlu0 %1232
        %1234 = vrot.lane.b32.xlu0 %v1227, 96
        %v1235 = vpop.permute.xlu0 %1234
        %1236 = vrot.lane.b32.xlu0 %v1228, 96
        %v1237 = vpop.permute.xlu0 %1236
        %v1238 = vsel %vm328, %v1233, %v1235
        %v1239 = vsel %vm328, %v1235, %v1237
        %v1243 = vadd.f32 %v1222, %v1238
        %v1244 = vadd.f32 %v1223, %v1239
        %v1245 = vadd.f32 %v1224, %v1237
        %s1246 = sld [smem:[#allocation2 + $0x18]]
        %s1247 = sld [smem:[#allocation2 + $0x49]]
        %v1248 = vstv %s1246
        %v1249 = vmul.f32 %v1248, %v219
        %v1250 = vmul.f32 %v1248, %v215
        %v1251 = vmul.f32 %v1248, %v220
        %1255 = vrot.lane.b32.xlu0 %v1249, 80
        %v1256 = vpop.permute.xlu0 %1255
        %1257 = vrot.lane.b32.xlu0 %v1250, 80
        %v1258 = vpop.permute.xlu0 %1257
        %1259 = vrot.lane.b32.xlu0 %v1251, 80
        %v1260 = vpop.permute.xlu0 %1259
        %v1261 = vsel %vm369, %v1256, %v1258
        %v1262 = vsel %vm369, %v1258, %v1260
        %v1266 = vadd.f32 %v1243, %v1261
        %v1267 = vadd.f32 %v1244, %v1262
        %v1268 = vadd.f32 %v1245, %v1260
        %v1269 = vstv %s1247
        %v1270 = vmul.f32 %v1269, %v231
        %v1271 = vmul.f32 %v1269, %v227
        %v1272 = vmul.f32 %v1269, %v232
        %1276 = vrot.lane.b32.xlu0 %v1270, 80
        %v1277 = vpop.permute.xlu0 %1276
        %1278 = vrot.lane.b32.xlu0 %v1271, 80
        %v1279 = vpop.permute.xlu0 %1278
        %1280 = vrot.lane.b32.xlu0 %v1272, 80
        %v1281 = vpop.permute.xlu0 %1280
        %v1282 = vsel %vm369, %v1277, %v1279
        %v1283 = vsel %vm369, %v1279, %v1281
        %v1287 = vadd.f32 %v1266, %v1282
        %v1288 = vadd.f32 %v1267, %v1283
        %v1289 = vadd.f32 %v1268, %v1281
        %s1290 = sld [smem:[#allocation2 + $0x1f]]
        %s1291 = sld [smem:[#allocation2 + $0x50]]
        %v1292 = vstv %s1290
        %v1293 = vmul.f32 %v1292, %v219
        %v1294 = vmul.f32 %v1292, %v215
        %v1295 = vmul.f32 %v1292, %v220
        %1299 = vrot.lane.b32.xlu0 %v1293, 64
        %v1300 = vpop.permute.xlu0 %1299
        %1301 = vrot.lane.b32.xlu0 %v1294, 64
        %v1302 = vpop.permute.xlu0 %1301
        %1303 = vrot.lane.b32.xlu0 %v1295, 64
        %v1304 = vpop.permute.xlu0 %1303
        %v1305 = vsel %vm410, %v1300, %v1302
        %v1306 = vsel %vm410, %v1302, %v1304
        %v1310 = vadd.f32 %v1287, %v1305
        %v1311 = vadd.f32 %v1288, %v1306
        %v1312 = vadd.f32 %v1289, %v1304
        %v1313 = vstv %s1291
        %v1314 = vmul.f32 %v1313, %v231
        %v1315 = vmul.f32 %v1313, %v227
        %v1316 = vmul.f32 %v1313, %v232
        %1320 = vrot.lane.b32.xlu0 %v1314, 64
        %v1321 = vpop.permute.xlu0 %1320
        %1322 = vrot.lane.b32.xlu0 %v1315, 64
        %v1323 = vpop.permute.xlu0 %1322
        %1324 = vrot.lane.b32.xlu0 %v1316, 64
        %v1325 = vpop.permute.xlu0 %1324
        %v1326 = vsel %vm410, %v1321, %v1323
        %v1327 = vsel %vm410, %v1323, %v1325
        %v1331 = vadd.f32 %v1310, %v1326
        %v1332 = vadd.f32 %v1311, %v1327
        %v1333 = vadd.f32 %v1312, %v1325
        %s1334 = sld [smem:[#allocation2 + $0x26]]
        %s1335 = sld [smem:[#allocation2 + $0x57]]
        %v1336 = vstv %s1334
        %v1337 = vmul.f32 %v1336, %v219
        %v1338 = vmul.f32 %v1336, %v215
        %v1339 = vmul.f32 %v1336, %v220
        %1343 = vrot.lane.b32.xlu0 %v1337, 48
        %v1344 = vpop.permute.xlu0 %1343
        %1345 = vrot.lane.b32.xlu0 %v1338, 48
        %v1346 = vpop.permute.xlu0 %1345
        %1347 = vrot.lane.b32.xlu0 %v1339, 48
        %v1348 = vpop.permute.xlu0 %1347
        %v1349 = vsel %vm451, %v1344, %v1346
        %v1350 = vsel %vm451, %v1346, %v1348
        %v1354 = vadd.f32 %v1331, %v1349
        %v1355 = vadd.f32 %v1332, %v1350
        %v1356 = vadd.f32 %v1333, %v1348
        %v1357 = vstv %s1335
        %v1358 = vmul.f32 %v1357, %v231
        %v1359 = vmul.f32 %v1357, %v227
        %v1360 = vmul.f32 %v1357, %v232
        %1364 = vrot.lane.b32.xlu0 %v1358, 48
        %v1365 = vpop.permute.xlu0 %1364
        %1366 = vrot.lane.b32.xlu0 %v1359, 48
        %v1367 = vpop.permute.xlu0 %1366
        %1368 = vrot.lane.b32.xlu0 %v1360, 48
        %v1369 = vpop.permute.xlu0 %1368
        %v1370 = vsel %vm451, %v1365, %v1367
        %v1371 = vsel %vm451, %v1367, %v1369
        %v1375 = vadd.f32 %v1354, %v1370
        %v1376 = vadd.f32 %v1355, %v1371
        %v1377 = vadd.f32 %v1356, %v1369
        %s1378 = sld [smem:[#allocation2 + $0x2d]]
        %s1379 = sld [smem:[#allocation2 + $0x5e]]
        %v1380 = vstv %s1378
        %v1381 = vmul.f32 %v1380, %v219
        %v1382 = vmul.f32 %v1380, %v215
        %v1383 = vmul.f32 %v1380, %v220
        %1387 = vrot.lane.b32.xlu0 %v1381, 32
        %v1388 = vpop.permute.xlu0 %1387
        %1389 = vrot.lane.b32.xlu0 %v1382, 32
        %v1390 = vpop.permute.xlu0 %1389
        %1391 = vrot.lane.b32.xlu0 %v1383, 32
        %v1392 = vpop.permute.xlu0 %1391
        %v1393 = vsel %vm492, %v1388, %v1390
        %v1394 = vsel %vm492, %v1390, %v1392
        %v1398 = vadd.f32 %v1375, %v1393
        %v1399 = vadd.f32 %v1376, %v1394
        %v1400 = vadd.f32 %v1377, %v1392
        %v1401 = vstv %s1379
        %v1402 = vmul.f32 %v1401, %v231
        %v1403 = vmul.f32 %v1401, %v227
        %v1404 = vmul.f32 %v1401, %v232
        %1408 = vrot.lane.b32.xlu0 %v1402, 32
        %v1409 = vpop.permute.xlu0 %1408
        %1410 = vrot.lane.b32.xlu0 %v1403, 32
        %v1411 = vpop.permute.xlu0 %1410
        %1412 = vrot.lane.b32.xlu0 %v1404, 32
        %v1413 = vpop.permute.xlu0 %1412
        %v1414 = vsel %vm492, %v1409, %v1411
        %v1415 = vsel %vm492, %v1411, %v1413
        %v1419 = vadd.f32 %v1398, %v1414
        %v1420 = vadd.f32 %v1399, %v1415
        %v1421 = vadd.f32 %v1400, %v1413
        %1425 = vrot.lane.b32.xlu0 %v1419, 125
        %v1426 = vpop.permute.xlu0 %1425
        %1427 = vrot.lane.b32.xlu0 %v1420, 125
        %v1428 = vpop.permute.xlu0 %1427
        %1429 = vrot.lane.b32.xlu0 %v1421, 125
        %v1430 = vpop.permute.xlu0 %1429
        %vm1431 = vcmask 1022976
        %v1432 = vsel %vm1431, %v1426, %v1428
        %v1433 = vsel %vm1431, %v1428, %v1430
        %v1436 = vadd.f32 %v1140, %v1432
        %v1437 = vadd.f32 %v1141, %v1433
        %s1438 = sld [smem:[#allocation2 + $0x4]]
        %s1439 = sld [smem:[#allocation2 + $0x35]]
        %v1440 = vstv %s1438
        %v1441 = vmul.f32 %v1440, %v219
        %v1442 = vmul.f32 %v1440, %v215
        %v1443 = vmul.f32 %v1440, %v220
        %v1444 = vadd.f32 %v1441, 0.0
        %v1445 = vadd.f32 %v1442, 0.0
        %v1446 = vadd.f32 %v1443, 0.0
        %v1447 = vstv %s1439
        %v1448 = vmul.f32 %v1447, %v231
        %v1449 = vmul.f32 %v1447, %v227
        %v1450 = vmul.f32 %v1447, %v232
        %v1451 = vadd.f32 %v1444, %v1448
        %v1452 = vadd.f32 %v1445, %v1449
        %v1453 = vadd.f32 %v1446, %v1450
        %s1454 = sld [smem:[#allocation2 + $0xb]]
        %s1455 = sld [smem:[#allocation2 + $0x3c]]
        %v1456 = vstv %s1454
        %v1457 = vmul.f32 %v1456, %v219
        %v1458 = vmul.f32 %v1456, %v215
        %v1459 = vmul.f32 %v1456, %v220
        %1463 = vrot.lane.b32.xlu0 %v1457, 112
        %v1464 = vpop.permute.xlu0 %1463
        %1465 = vrot.lane.b32.xlu0 %v1458, 112
        %v1466 = vpop.permute.xlu0 %1465
        %1467 = vrot.lane.b32.xlu0 %v1459, 112
        %v1468 = vpop.permute.xlu0 %1467
        %v1469 = vsel %vm287, %v1464, %v1466
        %v1470 = vsel %vm287, %v1466, %v1468
        %v1474 = vadd.f32 %v1451, %v1469
        %v1475 = vadd.f32 %v1452, %v1470
        %v1476 = vadd.f32 %v1453, %v1468
        %v1477 = vstv %s1455
        %v1478 = vmul.f32 %v1477, %v231
        %v1479 = vmul.f32 %v1477, %v227
        %v1480 = vmul.f32 %v1477, %v232
        %1484 = vrot.lane.b32.xlu0 %v1478, 112
        %v1485 = vpop.permute.xlu0 %1484
        %1486 = vrot.lane.b32.xlu0 %v1479, 112
        %v1487 = vpop.permute.xlu0 %1486
        %1488 = vrot.lane.b32.xlu0 %v1480, 112
        %v1489 = vpop.permute.xlu0 %1488
        %v1490 = vsel %vm287, %v1485, %v1487
        %v1491 = vsel %vm287, %v1487, %v1489
        %v1495 = vadd.f32 %v1474, %v1490
        %v1496 = vadd.f32 %v1475, %v1491
        %v1497 = vadd.f32 %v1476, %v1489
        %s1498 = sld [smem:[#allocation2 + $0x12]]
        %s1499 = sld [smem:[#allocation2 + $0x43]]
        %v1500 = vstv %s1498
        %v1501 = vmul.f32 %v1500, %v219
        %v1502 = vmul.f32 %v1500, %v215
        %v1503 = vmul.f32 %v1500, %v220
        %1507 = vrot.lane.b32.xlu0 %v1501, 96
        %v1508 = vpop.permute.xlu0 %1507
        %1509 = vrot.lane.b32.xlu0 %v1502, 96
        %v1510 = vpop.permute.xlu0 %1509
        %1511 = vrot.lane.b32.xlu0 %v1503, 96
        %v1512 = vpop.permute.xlu0 %1511
        %v1513 = vsel %vm328, %v1508, %v1510
        %v1514 = vsel %vm328, %v1510, %v1512
        %v1518 = vadd.f32 %v1495, %v1513
        %v1519 = vadd.f32 %v1496, %v1514
        %v1520 = vadd.f32 %v1497, %v1512
        %v1521 = vstv %s1499
        %v1522 = vmul.f32 %v1521, %v231
        %v1523 = vmul.f32 %v1521, %v227
        %v1524 = vmul.f32 %v1521, %v232
        %1528 = vrot.lane.b32.xlu0 %v1522, 96
        %v1529 = vpop.permute.xlu0 %1528
        %1530 = vrot.lane.b32.xlu0 %v1523, 96
        %v1531 = vpop.permute.xlu0 %1530
        %1532 = vrot.lane.b32.xlu0 %v1524, 96
        %v1533 = vpop.permute.xlu0 %1532
        %v1534 = vsel %vm328, %v1529, %v1531
        %v1535 = vsel %vm328, %v1531, %v1533
        %v1539 = vadd.f32 %v1518, %v1534
        %v1540 = vadd.f32 %v1519, %v1535
        %v1541 = vadd.f32 %v1520, %v1533
        %s1542 = sld [smem:[#allocation2 + $0x19]]
        %s1543 = sld [smem:[#allocation2 + $0x4a]]
        %v1544 = vstv %s1542
        %v1545 = vmul.f32 %v1544, %v219
        %v1546 = vmul.f32 %v1544, %v215
        %v1547 = vmul.f32 %v1544, %v220
        %1551 = vrot.lane.b32.xlu0 %v1545, 80
        %v1552 = vpop.permute.xlu0 %1551
        %1553 = vrot.lane.b32.xlu0 %v1546, 80
        %v1554 = vpop.permute.xlu0 %1553
        %1555 = vrot.lane.b32.xlu0 %v1547, 80
        %v1556 = vpop.permute.xlu0 %1555
        %v1557 = vsel %vm369, %v1552, %v1554
        %v1558 = vsel %vm369, %v1554, %v1556
        %v1562 = vadd.f32 %v1539, %v1557
        %v1563 = vadd.f32 %v1540, %v1558
        %v1564 = vadd.f32 %v1541, %v1556
        %v1565 = vstv %s1543
        %v1566 = vmul.f32 %v1565, %v231
        %v1567 = vmul.f32 %v1565, %v227
        %v1568 = vmul.f32 %v1565, %v232
        %1572 = vrot.lane.b32.xlu0 %v1566, 80
        %v1573 = vpop.permute.xlu0 %1572
        %1574 = vrot.lane.b32.xlu0 %v1567, 80
        %v1575 = vpop.permute.xlu0 %1574
        %1576 = vrot.lane.b32.xlu0 %v1568, 80
        %v1577 = vpop.permute.xlu0 %1576
        %v1578 = vsel %vm369, %v1573, %v1575
        %v1579 = vsel %vm369, %v1575, %v1577
        %v1583 = vadd.f32 %v1562, %v1578
        %v1584 = vadd.f32 %v1563, %v1579
        %v1585 = vadd.f32 %v1564, %v1577
        %s1586 = sld [smem:[#allocation2 + $0x20]]
        %s1587 = sld [smem:[#allocation2 + $0x51]]
        %v1588 = vstv %s1586
        %v1589 = vmul.f32 %v1588, %v219
        %v1590 = vmul.f32 %v1588, %v215
        %v1591 = vmul.f32 %v1588, %v220
        %1595 = vrot.lane.b32.xlu0 %v1589, 64
        %v1596 = vpop.permute.xlu0 %1595
        %1597 = vrot.lane.b32.xlu0 %v1590, 64
        %v1598 = vpop.permute.xlu0 %1597
        %1599 = vrot.lane.b32.xlu0 %v1591, 64
        %v1600 = vpop.permute.xlu0 %1599
        %v1601 = vsel %vm410, %v1596, %v1598
        %v1602 = vsel %vm410, %v1598, %v1600
        %v1606 = vadd.f32 %v1583, %v1601
        %v1607 = vadd.f32 %v1584, %v1602
        %v1608 = vadd.f32 %v1585, %v1600
        %v1609 = vstv %s1587
        %v1610 = vmul.f32 %v1609, %v231
        %v1611 = vmul.f32 %v1609, %v227
        %v1612 = vmul.f32 %v1609, %v232
        %1616 = vrot.lane.b32.xlu0 %v1610, 64
        %v1617 = vpop.permute.xlu0 %1616
        %1618 = vrot.lane.b32.xlu0 %v1611, 64
        %v1619 = vpop.permute.xlu0 %1618
        %1620 = vrot.lane.b32.xlu0 %v1612, 64
        %v1621 = vpop.permute.xlu0 %1620
        %v1622 = vsel %vm410, %v1617, %v1619
        %v1623 = vsel %vm410, %v1619, %v1621
        %v1627 = vadd.f32 %v1606, %v1622
        %v1628 = vadd.f32 %v1607, %v1623
        %v1629 = vadd.f32 %v1608, %v1621
        %s1630 = sld [smem:[#allocation2 + $0x27]]
        %s1631 = sld [smem:[#allocation2 + $0x58]]
        %v1632 = vstv %s1630
        %v1633 = vmul.f32 %v1632, %v219
        %v1634 = vmul.f32 %v1632, %v215
        %v1635 = vmul.f32 %v1632, %v220
        %1639 = vrot.lane.b32.xlu0 %v1633, 48
        %v1640 = vpop.permute.xlu0 %1639
        %1641 = vrot.lane.b32.xlu0 %v1634, 48
        %v1642 = vpop.permute.xlu0 %1641
        %1643 = vrot.lane.b32.xlu0 %v1635, 48
        %v1644 = vpop.permute.xlu0 %1643
        %v1645 = vsel %vm451, %v1640, %v1642
        %v1646 = vsel %vm451, %v1642, %v1644
        %v1650 = vadd.f32 %v1627, %v1645
        %v1651 = vadd.f32 %v1628, %v1646
        %v1652 = vadd.f32 %v1629, %v1644
        %v1653 = vstv %s1631
        %v1654 = vmul.f32 %v1653, %v231
        %v1655 = vmul.f32 %v1653, %v227
        %v1656 = vmul.f32 %v1653, %v232
        %1660 = vrot.lane.b32.xlu0 %v1654, 48
        %v1661 = vpop.permute.xlu0 %1660
        %1662 = vrot.lane.b32.xlu0 %v1655, 48
        %v1663 = vpop.permute.xlu0 %1662
        %1664 = vrot.lane.b32.xlu0 %v1656, 48
        %v1665 = vpop.permute.xlu0 %1664
        %v1666 = vsel %vm451, %v1661, %v1663
        %v1667 = vsel %vm451, %v1663, %v1665
        %v1671 = vadd.f32 %v1650, %v1666
        %v1672 = vadd.f32 %v1651, %v1667
        %v1673 = vadd.f32 %v1652, %v1665
        %s1674 = sld [smem:[#allocation2 + $0x2e]]
        %s1675 = sld [smem:[#allocation2 + $0x5f]]
        %v1676 = vstv %s1674
        %v1677 = vmul.f32 %v1676, %v219
        %v1678 = vmul.f32 %v1676, %v215
        %v1679 = vmul.f32 %v1676, %v220
        %1683 = vrot.lane.b32.xlu0 %v1677, 32
        %v1684 = vpop.permute.xlu0 %1683
        %1685 = vrot.lane.b32.xlu0 %v1678, 32
        %v1686 = vpop.permute.xlu0 %1685
        %1687 = vrot.lane.b32.xlu0 %v1679, 32
        %v1688 = vpop.permute.xlu0 %1687
        %v1689 = vsel %vm492, %v1684, %v1686
        %v1690 = vsel %vm492, %v1686, %v1688
        %v1694 = vadd.f32 %v1671, %v1689
        %v1695 = vadd.f32 %v1672, %v1690
        %v1696 = vadd.f32 %v1673, %v1688
        %v1697 = vstv %s1675
        %v1698 = vmul.f32 %v1697, %v231
        %v1699 = vmul.f32 %v1697, %v227
        %v1700 = vmul.f32 %v1697, %v232
        %1704 = vrot.lane.b32.xlu0 %v1698, 32
        %v1705 = vpop.permute.xlu0 %1704
        %1706 = vrot.lane.b32.xlu0 %v1699, 32
        %v1707 = vpop.permute.xlu0 %1706
        %1708 = vrot.lane.b32.xlu0 %v1700, 32
        %v1709 = vpop.permute.xlu0 %1708
        %v1710 = vsel %vm492, %v1705, %v1707
        %v1711 = vsel %vm492, %v1707, %v1709
        %v1715 = vadd.f32 %v1694, %v1710
        %v1716 = vadd.f32 %v1695, %v1711
        %v1717 = vadd.f32 %v1696, %v1709
        %v1718 = vadd.s32 %v258, 1
        %v1719 = vadd.s32 %v259, 1
        %vm1720 = vcmp.ge.s32.totalorder %v1718, 0
        %vm1721 = vcmp.ge.s32.totalorder %v1719, 0
        %vm1722 = vcmp.lt.s32.totalorder %v1718, 16
        %vm1723 = vcmp.lt.s32.totalorder %v1719, 16
        %vm1724 = vmand %vm1720, %vm1722
        %vm1725 = vmand %vm1721, %vm1723
        %1729 = vrot.lane.b32.xlu0 %v1715, 124
        %v1730 = vpop.permute.xlu0 %1729
        %1731 = vrot.lane.b32.xlu0 %v1716, 124
        %v1732 = vpop.permute.xlu0 %1731
        %1733 = vrot.lane.b32.xlu0 %v1717, 124
        %v1734 = vpop.permute.xlu0 %1733
        %vm1735 = vcmask 1014784
        %v1736 = vsel %vm1735, %v1730, %v1732
        %v1737 = vsel %vm1735, %v1732, %v1734
        %v1740 = vsel %vm1724, %v1736, 0.0
        %v1741 = vsel %vm1725, %v1737, 0.0
        %v1742 = vadd.f32 %v1436, %v1740
        %v1743 = vadd.f32 %v1437, %v1741
        %s1744 = sld [smem:[#allocation2 + $0x5]]
        %s1745 = sld [smem:[#allocation2 + $0x36]]
        %v1746 = vstv %s1744
        %v1747 = vmul.f32 %v1746, %v219
        %v1748 = vmul.f32 %v1746, %v215
        %v1749 = vmul.f32 %v1746, %v220
        %v1750 = vadd.f32 %v1747, 0.0
        %v1751 = vadd.f32 %v1748, 0.0
        %v1752 = vadd.f32 %v1749, 0.0
        %v1753 = vstv %s1745
        %v1754 = vmul.f32 %v1753, %v231
        %v1755 = vmul.f32 %v1753, %v227
        %v1756 = vmul.f32 %v1753, %v232
        %v1757 = vadd.f32 %v1750, %v1754
        %v1758 = vadd.f32 %v1751, %v1755
        %v1759 = vadd.f32 %v1752, %v1756
        %s1760 = sld [smem:[#allocation2 + $0xc]]
        %s1761 = sld [smem:[#allocation2 + $0x3d]]
        %v1762 = vstv %s1760
        %v1763 = vmul.f32 %v1762, %v219
        %v1764 = vmul.f32 %v1762, %v215
        %v1765 = vmul.f32 %v1762, %v220
        %1769 = vrot.lane.b32.xlu0 %v1763, 112
        %v1770 = vpop.permute.xlu0 %1769
        %1771 = vrot.lane.b32.xlu0 %v1764, 112
        %v1772 = vpop.permute.xlu0 %1771
        %1773 = vrot.lane.b32.xlu0 %v1765, 112
        %v1774 = vpop.permute.xlu0 %1773
        %v1775 = vsel %vm287, %v1770, %v1772
        %v1776 = vsel %vm287, %v1772, %v1774
        %v1780 = vadd.f32 %v1757, %v1775
        %v1781 = vadd.f32 %v1758, %v1776
        %v1782 = vadd.f32 %v1759, %v1774
        %v1783 = vstv %s1761
        %v1784 = vmul.f32 %v1783, %v231
        %v1785 = vmul.f32 %v1783, %v227
        %v1786 = vmul.f32 %v1783, %v232
        %1790 = vrot.lane.b32.xlu0 %v1784, 112
        %v1791 = vpop.permute.xlu0 %1790
        %1792 = vrot.lane.b32.xlu0 %v1785, 112
        %v1793 = vpop.permute.xlu0 %1792
        %1794 = vrot.lane.b32.xlu0 %v1786, 112
        %v1795 = vpop.permute.xlu0 %1794
        %v1796 = vsel %vm287, %v1791, %v1793
        %v1797 = vsel %vm287, %v1793, %v1795
        %v1801 = vadd.f32 %v1780, %v1796
        %v1802 = vadd.f32 %v1781, %v1797
        %v1803 = vadd.f32 %v1782, %v1795
        %s1804 = sld [smem:[#allocation2 + $0x13]]
        %s1805 = sld [smem:[#allocation2 + $0x44]]
        %v1806 = vstv %s1804
        %v1807 = vmul.f32 %v1806, %v219
        %v1808 = vmul.f32 %v1806, %v215
        %v1809 = vmul.f32 %v1806, %v220
        %1813 = vrot.lane.b32.xlu0 %v1807, 96
        %v1814 = vpop.permute.xlu0 %1813
        %1815 = vrot.lane.b32.xlu0 %v1808, 96
        %v1816 = vpop.permute.xlu0 %1815
        %1817 = vrot.lane.b32.xlu0 %v1809, 96
        %v1818 = vpop.permute.xlu0 %1817
        %v1819 = vsel %vm328, %v1814, %v1816
        %v1820 = vsel %vm328, %v1816, %v1818
        %v1824 = vadd.f32 %v1801, %v1819
        %v1825 = vadd.f32 %v1802, %v1820
        %v1826 = vadd.f32 %v1803, %v1818
        %v1827 = vstv %s1805
        %v1828 = vmul.f32 %v1827, %v231
        %v1829 = vmul.f32 %v1827, %v227
        %v1830 = vmul.f32 %v1827, %v232
        %1834 = vrot.lane.b32.xlu0 %v1828, 96
        %v1835 = vpop.permute.xlu0 %1834
        %1836 = vrot.lane.b32.xlu0 %v1829, 96
        %v1837 = vpop.permute.xlu0 %1836
        %1838 = vrot.lane.b32.xlu0 %v1830, 96
        %v1839 = vpop.permute.xlu0 %1838
        %v1840 = vsel %vm328, %v1835, %v1837
        %v1841 = vsel %vm328, %v1837, %v1839
        %v1845 = vadd.f32 %v1824, %v1840
        %v1846 = vadd.f32 %v1825, %v1841
        %v1847 = vadd.f32 %v1826, %v1839
        %s1848 = sld [smem:[#allocation2 + $0x1a]]
        %s1849 = sld [smem:[#allocation2 + $0x4b]]
        %v1850 = vstv %s1848
        %v1851 = vmul.f32 %v1850, %v219
        %v1852 = vmul.f32 %v1850, %v215
        %v1853 = vmul.f32 %v1850, %v220
        %1857 = vrot.lane.b32.xlu0 %v1851, 80
        %v1858 = vpop.permute.xlu0 %1857
        %1859 = vrot.lane.b32.xlu0 %v1852, 80
        %v1860 = vpop.permute.xlu0 %1859
        %1861 = vrot.lane.b32.xlu0 %v1853, 80
        %v1862 = vpop.permute.xlu0 %1861
        %v1863 = vsel %vm369, %v1858, %v1860
        %v1864 = vsel %vm369, %v1860, %v1862
        %v1868 = vadd.f32 %v1845, %v1863
        %v1869 = vadd.f32 %v1846, %v1864
        %v1870 = vadd.f32 %v1847, %v1862
        %v1871 = vstv %s1849
        %v1872 = vmul.f32 %v1871, %v231
        %v1873 = vmul.f32 %v1871, %v227
        %v1874 = vmul.f32 %v1871, %v232
        %1878 = vrot.lane.b32.xlu0 %v1872, 80
        %v1879 = vpop.permute.xlu0 %1878
        %1880 = vrot.lane.b32.xlu0 %v1873, 80
        %v1881 = vpop.permute.xlu0 %1880
        %1882 = vrot.lane.b32.xlu0 %v1874, 80
        %v1883 = vpop.permute.xlu0 %1882
        %v1884 = vsel %vm369, %v1879, %v1881
        %v1885 = vsel %vm369, %v1881, %v1883
        %v1889 = vadd.f32 %v1868, %v1884
        %v1890 = vadd.f32 %v1869, %v1885
        %v1891 = vadd.f32 %v1870, %v1883
        %s1892 = sld [smem:[#allocation2 + $0x21]]
        %s1893 = sld [smem:[#allocation2 + $0x52]]
        %v1894 = vstv %s1892
        %v1895 = vmul.f32 %v1894, %v219
        %v1896 = vmul.f32 %v1894, %v215
        %v1897 = vmul.f32 %v1894, %v220
        %1901 = vrot.lane.b32.xlu0 %v1895, 64
        %v1902 = vpop.permute.xlu0 %1901
        %1903 = vrot.lane.b32.xlu0 %v1896, 64
        %v1904 = vpop.permute.xlu0 %1903
        %1905 = vrot.lane.b32.xlu0 %v1897, 64
        %v1906 = vpop.permute.xlu0 %1905
        %v1907 = vsel %vm410, %v1902, %v1904
        %v1908 = vsel %vm410, %v1904, %v1906
        %v1912 = vadd.f32 %v1889, %v1907
        %v1913 = vadd.f32 %v1890, %v1908
        %v1914 = vadd.f32 %v1891, %v1906
        %v1915 = vstv %s1893
        %v1916 = vmul.f32 %v1915, %v231
        %v1917 = vmul.f32 %v1915, %v227
        %v1918 = vmul.f32 %v1915, %v232
        %1922 = vrot.lane.b32.xlu0 %v1916, 64
        %v1923 = vpop.permute.xlu0 %1922
        %1924 = vrot.lane.b32.xlu0 %v1917, 64
        %v1925 = vpop.permute.xlu0 %1924
        %1926 = vrot.lane.b32.xlu0 %v1918, 64
        %v1927 = vpop.permute.xlu0 %1926
        %v1928 = vsel %vm410, %v1923, %v1925
        %v1929 = vsel %vm410, %v1925, %v1927
        %v1933 = vadd.f32 %v1912, %v1928
        %v1934 = vadd.f32 %v1913, %v1929
        %v1935 = vadd.f32 %v1914, %v1927
        %s1936 = sld [smem:[#allocation2 + $0x28]]
        %s1937 = sld [smem:[#allocation2 + $0x59]]
        %v1938 = vstv %s1936
        %v1939 = vmul.f32 %v1938, %v219
        %v1940 = vmul.f32 %v1938, %v215
        %v1941 = vmul.f32 %v1938, %v220
        %1945 = vrot.lane.b32.xlu0 %v1939, 48
        %v1946 = vpop.permute.xlu0 %1945
        %1947 = vrot.lane.b32.xlu0 %v1940, 48
        %v1948 = vpop.permute.xlu0 %1947
        %1949 = vrot.lane.b32.xlu0 %v1941, 48
        %v1950 = vpop.permute.xlu0 %1949
        %v1951 = vsel %vm451, %v1946, %v1948
        %v1952 = vsel %vm451, %v1948, %v1950
        %v1956 = vadd.f32 %v1933, %v1951
        %v1957 = vadd.f32 %v1934, %v1952
        %v1958 = vadd.f32 %v1935, %v1950
        %v1959 = vstv %s1937
        %v1960 = vmul.f32 %v1959, %v231
        %v1961 = vmul.f32 %v1959, %v227
        %v1962 = vmul.f32 %v1959, %v232
        %1966 = vrot.lane.b32.xlu0 %v1960, 48
        %v1967 = vpop.permute.xlu0 %1966
        %1968 = vrot.lane.b32.xlu0 %v1961, 48
        %v1969 = vpop.permute.xlu0 %1968
        %1970 = vrot.lane.b32.xlu0 %v1962, 48
        %v1971 = vpop.permute.xlu0 %1970
        %v1972 = vsel %vm451, %v1967, %v1969
        %v1973 = vsel %vm451, %v1969, %v1971
        %v1977 = vadd.f32 %v1956, %v1972
        %v1978 = vadd.f32 %v1957, %v1973
        %v1979 = vadd.f32 %v1958, %v1971
        %s1980 = sld [smem:[#allocation2 + $0x2f]]
        %s1981 = sld [smem:[#allocation2 + $0x60]]
        %v1982 = vstv %s1980
        %v1983 = vmul.f32 %v1982, %v219
        %v1984 = vmul.f32 %v1982, %v215
        %v1985 = vmul.f32 %v1982, %v220
        %1989 = vrot.lane.b32.xlu0 %v1983, 32
        %v1990 = vpop.permute.xlu0 %1989
        %1991 = vrot.lane.b32.xlu0 %v1984, 32
        %v1992 = vpop.permute.xlu0 %1991
        %1993 = vrot.lane.b32.xlu0 %v1985, 32
        %v1994 = vpop.permute.xlu0 %1993
        %v1995 = vsel %vm492, %v1990, %v1992
        %v1996 = vsel %vm492, %v1992, %v1994
        %v2000 = vadd.f32 %v1977, %v1995
        %v2001 = vadd.f32 %v1978, %v1996
        %v2002 = vadd.f32 %v1979, %v1994
        %v2003 = vstv %s1981
        %v2004 = vmul.f32 %v2003, %v231
        %v2005 = vmul.f32 %v2003, %v227
        %v2006 = vmul.f32 %v2003, %v232
        %2010 = vrot.lane.b32.xlu0 %v2004, 32
        %v2011 = vpop.permute.xlu0 %2010
        %2012 = vrot.lane.b32.xlu0 %v2005, 32
        %v2013 = vpop.permute.xlu0 %2012
        %2014 = vrot.lane.b32.xlu0 %v2006, 32
        %v2015 = vpop.permute.xlu0 %2014
        %v2016 = vsel %vm492, %v2011, %v2013
        %v2017 = vsel %vm492, %v2013, %v2015
        %v2021 = vadd.f32 %v2000, %v2016
        %v2022 = vadd.f32 %v2001, %v2017
        %v2023 = vadd.f32 %v2002, %v2015
        %v2024 = vadd.s32 %v258, 2
        %v2025 = vadd.s32 %v259, 2
        %vm2026 = vcmp.ge.s32.totalorder %v2024, 0
        %vm2027 = vcmp.ge.s32.totalorder %v2025, 0
        %vm2028 = vcmp.lt.s32.totalorder %v2024, 16
        %vm2029 = vcmp.lt.s32.totalorder %v2025, 16
        %vm2030 = vmand %vm2026, %vm2028
        %vm2031 = vmand %vm2027, %vm2029
        %2035 = vrot.lane.b32.xlu0 %v2021, 123
        %v2036 = vpop.permute.xlu0 %2035
        %2037 = vrot.lane.b32.xlu0 %v2022, 123
        %v2038 = vpop.permute.xlu0 %2037
        %2039 = vrot.lane.b32.xlu0 %v2023, 123
        %v2040 = vpop.permute.xlu0 %2039
        %vm2041 = vcmask 1006592
        %v2042 = vsel %vm2041, %v2036, %v2038
        %v2043 = vsel %vm2041, %v2038, %v2040
        %v2046 = vsel %vm2030, %v2042, 0.0
        %v2047 = vsel %vm2031, %v2043, 0.0
        %v2048 = vadd.f32 %v1742, %v2046
        %v2049 = vadd.f32 %v1743, %v2047
        %s2050 = sld [smem:[#allocation2 + $0x6]]
        %s2051 = sld [smem:[#allocation2 + $0x37]]
        %v2052 = vstv %s2050
        %v2053 = vmul.f32 %v2052, %v219
        %v2054 = vmul.f32 %v2052, %v215
        %v2055 = vmul.f32 %v2052, %v220
        %v2056 = vadd.f32 %v2053, 0.0
        %v2057 = vadd.f32 %v2054, 0.0
        %v2058 = vadd.f32 %v2055, 0.0
        %v2059 = vstv %s2051
        %v2060 = vmul.f32 %v2059, %v231
        %v2061 = vmul.f32 %v2059, %v227
        %v2062 = vmul.f32 %v2059, %v232
        %v2063 = vadd.f32 %v2056, %v2060
        %v2064 = vadd.f32 %v2057, %v2061
        %v2065 = vadd.f32 %v2058, %v2062
        %s2066 = sld [smem:[#allocation2 + $0xd]]
        %s2067 = sld [smem:[#allocation2 + $0x3e]]
        %v2068 = vstv %s2066
        %v2069 = vmul.f32 %v2068, %v219
        %v2070 = vmul.f32 %v2068, %v215
        %v2071 = vmul.f32 %v2068, %v220
        %2075 = vrot.lane.b32.xlu0 %v2069, 112
        %v2076 = vpop.permute.xlu0 %2075
        %2077 = vrot.lane.b32.xlu0 %v2070, 112
        %v2078 = vpop.permute.xlu0 %2077
        %2079 = vrot.lane.b32.xlu0 %v2071, 112
        %v2080 = vpop.permute.xlu0 %2079
        %v2081 = vsel %vm287, %v2076, %v2078
        %v2082 = vsel %vm287, %v2078, %v2080
        %v2086 = vadd.f32 %v2063, %v2081
        %v2087 = vadd.f32 %v2064, %v2082
        %v2088 = vadd.f32 %v2065, %v2080
        %v2089 = vstv %s2067
        %v2090 = vmul.f32 %v2089, %v231
        %v2091 = vmul.f32 %v2089, %v227
        %v2092 = vmul.f32 %v2089, %v232
        %2096 = vrot.lane.b32.xlu0 %v2090, 112
        %v2097 = vpop.permute.xlu0 %2096
        %2098 = vrot.lane.b32.xlu0 %v2091, 112
        %v2099 = vpop.permute.xlu0 %2098
        %2100 = vrot.lane.b32.xlu0 %v2092, 112
        %v2101 = vpop.permute.xlu0 %2100
        %v2102 = vsel %vm287, %v2097, %v2099
        %v2103 = vsel %vm287, %v2099, %v2101
        %v2107 = vadd.f32 %v2086, %v2102
        %v2108 = vadd.f32 %v2087, %v2103
        %v2109 = vadd.f32 %v2088, %v2101
        %s2110 = sld [smem:[#allocation2 + $0x14]]
        %s2111 = sld [smem:[#allocation2 + $0x45]]
        %v2112 = vstv %s2110
        %v2113 = vmul.f32 %v2112, %v219
        %v2114 = vmul.f32 %v2112, %v215
        %v2115 = vmul.f32 %v2112, %v220
        %2119 = vrot.lane.b32.xlu0 %v2113, 96
        %v2120 = vpop.permute.xlu0 %2119
        %2121 = vrot.lane.b32.xlu0 %v2114, 96
        %v2122 = vpop.permute.xlu0 %2121
        %2123 = vrot.lane.b32.xlu0 %v2115, 96
        %v2124 = vpop.permute.xlu0 %2123
        %v2125 = vsel %vm328, %v2120, %v2122
        %v2126 = vsel %vm328, %v2122, %v2124
        %v2130 = vadd.f32 %v2107, %v2125
        %v2131 = vadd.f32 %v2108, %v2126
        %v2132 = vadd.f32 %v2109, %v2124
        %v2133 = vstv %s2111
        %v2134 = vmul.f32 %v2133, %v231
        %v2135 = vmul.f32 %v2133, %v227
        %v2136 = vmul.f32 %v2133, %v232
        %2140 = vrot.lane.b32.xlu0 %v2134, 96
        %v2141 = vpop.permute.xlu0 %2140
        %2142 = vrot.lane.b32.xlu0 %v2135, 96
        %v2143 = vpop.permute.xlu0 %2142
        %2144 = vrot.lane.b32.xlu0 %v2136, 96
        %v2145 = vpop.permute.xlu0 %2144
        %v2146 = vsel %vm328, %v2141, %v2143
        %v2147 = vsel %vm328, %v2143, %v2145
        %v2151 = vadd.f32 %v2130, %v2146
        %v2152 = vadd.f32 %v2131, %v2147
        %v2153 = vadd.f32 %v2132, %v2145
        %s2154 = sld [smem:[#allocation2 + $0x1b]]
        %s2155 = sld [smem:[#allocation2 + $0x4c]]
        %v2156 = vstv %s2154
        %v2157 = vmul.f32 %v2156, %v219
        %v2158 = vmul.f32 %v2156, %v215
        %v2159 = vmul.f32 %v2156, %v220
        %2163 = vrot.lane.b32.xlu0 %v2157, 80
        %v2164 = vpop.permute.xlu0 %2163
        %2165 = vrot.lane.b32.xlu0 %v2158, 80
        %v2166 = vpop.permute.xlu0 %2165
        %2167 = vrot.lane.b32.xlu0 %v2159, 80
        %v2168 = vpop.permute.xlu0 %2167
        %v2169 = vsel %vm369, %v2164, %v2166
        %v2170 = vsel %vm369, %v2166, %v2168
        %v2174 = vadd.f32 %v2151, %v2169
        %v2175 = vadd.f32 %v2152, %v2170
        %v2176 = vadd.f32 %v2153, %v2168
        %v2177 = vstv %s2155
        %v2178 = vmul.f32 %v2177, %v231
        %v2179 = vmul.f32 %v2177, %v227
        %v2180 = vmul.f32 %v2177, %v232
        %2184 = vrot.lane.b32.xlu0 %v2178, 80
        %v2185 = vpop.permute.xlu0 %2184
        %2186 = vrot.lane.b32.xlu0 %v2179, 80
        %v2187 = vpop.permute.xlu0 %2186
        %2188 = vrot.lane.b32.xlu0 %v2180, 80
        %v2189 = vpop.permute.xlu0 %2188
        %v2190 = vsel %vm369, %v2185, %v2187
        %v2191 = vsel %vm369, %v2187, %v2189
        %v2195 = vadd.f32 %v2174, %v2190
        %v2196 = vadd.f32 %v2175, %v2191
        %v2197 = vadd.f32 %v2176, %v2189
        %s2198 = sld [smem:[#allocation2 + $0x22]]
        %s2199 = sld [smem:[#allocation2 + $0x53]]
        %v2200 = vstv %s2198
        %v2201 = vmul.f32 %v2200, %v219
        %v2202 = vmul.f32 %v2200, %v215
        %v2203 = vmul.f32 %v2200, %v220
        %2207 = vrot.lane.b32.xlu0 %v2201, 64
        %v2208 = vpop.permute.xlu0 %2207
        %2209 = vrot.lane.b32.xlu0 %v2202, 64
        %v2210 = vpop.permute.xlu0 %2209
        %2211 = vrot.lane.b32.xlu0 %v2203, 64
        %v2212 = vpop.permute.xlu0 %2211
        %v2213 = vsel %vm410, %v2208, %v2210
        %v2214 = vsel %vm410, %v2210, %v2212
        %v2218 = vadd.f32 %v2195, %v2213
        %v2219 = vadd.f32 %v2196, %v2214
        %v2220 = vadd.f32 %v2197, %v2212
        %v2221 = vstv %s2199
        %v2222 = vmul.f32 %v2221, %v231
        %v2223 = vmul.f32 %v2221, %v227
        %v2224 = vmul.f32 %v2221, %v232
        %2228 = vrot.lane.b32.xlu0 %v2222, 64
        %v2229 = vpop.permute.xlu0 %2228
        %2230 = vrot.lane.b32.xlu0 %v2223, 64
        %v2231 = vpop.permute.xlu0 %2230
        %2232 = vrot.lane.b32.xlu0 %v2224, 64
        %v2233 = vpop.permute.xlu0 %2232
        %v2234 = vsel %vm410, %v2229, %v2231
        %v2235 = vsel %vm410, %v2231, %v2233
        %v2239 = vadd.f32 %v2218, %v2234
        %v2240 = vadd.f32 %v2219, %v2235
        %v2241 = vadd.f32 %v2220, %v2233
        %s2242 = sld [smem:[#allocation2 + $0x29]]
        %s2243 = sld [smem:[#allocation2 + $0x5a]]
        %v2244 = vstv %s2242
        %v2245 = vmul.f32 %v2244, %v219
        %v2246 = vmul.f32 %v2244, %v215
        %v2247 = vmul.f32 %v2244, %v220
        %2251 = vrot.lane.b32.xlu0 %v2245, 48
        %v2252 = vpop.permute.xlu0 %2251
        %2253 = vrot.lane.b32.xlu0 %v2246, 48
        %v2254 = vpop.permute.xlu0 %2253
        %2255 = vrot.lane.b32.xlu0 %v2247, 48
        %v2256 = vpop.permute.xlu0 %2255
        %v2257 = vsel %vm451, %v2252, %v2254
        %v2258 = vsel %vm451, %v2254, %v2256
        %v2262 = vadd.f32 %v2239, %v2257
        %v2263 = vadd.f32 %v2240, %v2258
        %v2264 = vadd.f32 %v2241, %v2256
        %v2265 = vstv %s2243
        %v2266 = vmul.f32 %v2265, %v231
        %v2267 = vmul.f32 %v2265, %v227
        %v2268 = vmul.f32 %v2265, %v232
        %2272 = vrot.lane.b32.xlu0 %v2266, 48
        %v2273 = vpop.permute.xlu0 %2272
        %2274 = vrot.lane.b32.xlu0 %v2267, 48
        %v2275 = vpop.permute.xlu0 %2274
        %2276 = vrot.lane.b32.xlu0 %v2268, 48
        %v2277 = vpop.permute.xlu0 %2276
        %v2278 = vsel %vm451, %v2273, %v2275
        %v2279 = vsel %vm451, %v2275, %v2277
        %v2283 = vadd.f32 %v2262, %v2278
        %v2284 = vadd.f32 %v2263, %v2279
        %v2285 = vadd.f32 %v2264, %v2277
        %s2286 = sld [smem:[#allocation2 + $0x30]]
        %s2287 = sld [smem:[#allocation2 + $0x61]]
        %v2288 = vstv %s2286
        %v2289 = vmul.f32 %v2288, %v219
        %v2290 = vmul.f32 %v2288, %v215
        %v2291 = vmul.f32 %v2288, %v220
        %2295 = vrot.lane.b32.xlu0 %v2289, 32
        %v2296 = vpop.permute.xlu0 %2295
        %2297 = vrot.lane.b32.xlu0 %v2290, 32
        %v2298 = vpop.permute.xlu0 %2297
        %2299 = vrot.lane.b32.xlu0 %v2291, 32
        %v2300 = vpop.permute.xlu0 %2299
        %v2301 = vsel %vm492, %v2296, %v2298
        %v2302 = vsel %vm492, %v2298, %v2300
        %v2306 = vadd.f32 %v2283, %v2301
        %v2307 = vadd.f32 %v2284, %v2302
        %v2308 = vadd.f32 %v2285, %v2300
        %v2309 = vstv %s2287
        %v2310 = vmul.f32 %v2309, %v231
        %v2311 = vmul.f32 %v2309, %v227
        %v2312 = vmul.f32 %v2309, %v232
        %2316 = vrot.lane.b32.xlu0 %v2310, 32
        %v2317 = vpop.permute.xlu0 %2316
        %2318 = vrot.lane.b32.xlu0 %v2311, 32
        %v2319 = vpop.permute.xlu0 %2318
        %2320 = vrot.lane.b32.xlu0 %v2312, 32
        %v2321 = vpop.permute.xlu0 %2320
        %v2322 = vsel %vm492, %v2317, %v2319
        %v2323 = vsel %vm492, %v2319, %v2321
        %v2327 = vadd.f32 %v2306, %v2322
        %v2328 = vadd.f32 %v2307, %v2323
        %v2329 = vadd.f32 %v2308, %v2321
        %v2330 = vadd.s32 %v258, 3
        %v2331 = vadd.s32 %v259, 3
        %vm2332 = vcmp.ge.s32.totalorder %v2330, 0
        %vm2333 = vcmp.ge.s32.totalorder %v2331, 0
        %vm2334 = vcmp.lt.s32.totalorder %v2330, 16
        %vm2335 = vcmp.lt.s32.totalorder %v2331, 16
        %vm2336 = vmand %vm2332, %vm2334
        %vm2337 = vmand %vm2333, %vm2335
        %2341 = vrot.lane.b32.xlu0 %v2327, 122
        %v2342 = vpop.permute.xlu0 %2341
        %2343 = vrot.lane.b32.xlu0 %v2328, 122
        %v2344 = vpop.permute.xlu0 %2343
        %2345 = vrot.lane.b32.xlu0 %v2329, 122
        %v2346 = vpop.permute.xlu0 %2345
        %vm2347 = vcmask 998400
        %v2348 = vsel %vm2347, %v2342, %v2344
        %v2349 = vsel %vm2347, %v2344, %v2346
        %v2352 = vsel %vm2336, %v2348, 0.0
        %v2353 = vsel %vm2337, %v2349, 0.0
        %v2354 = vadd.f32 %v2048, %v2352
        %v2355 = vadd.f32 %v2049, %v2353
        %v2356 = vxor.u32 %v2354, 2147483648
        %v2357 = vxor.u32 %v2355, 2147483648
        %v2358 = vmul.f32 %v2356, 1.442695
        %v2359 = vpow.pop %v2358
        %v2360 = vmul.f32 %v2357, 1.442695
        %v2361 = vpow.pop %v2360
        %v2362 = vadd.f32 %v2359, 1.0
        %v2363 = vadd.f32 %v2361, 1.0
        %v2364 = vrcp.pop %v2362
        %v2365 = vmul.f32 1.0, %v2364
        %v2366 = vrcp.pop %v2363
        %v2367 = vmul.f32 1.0, %v2366
        %v2368 = vlaneseq
        %v2369 = vshrl.u32 %v2368, 7
        %v2370 = vsub.s32 0, %v2369
        %v2371 = vrot.slane %v2365, %v2370
        %v2372 = vlaneseq
        %v2373 = vshrl.u32 %v2372, 7
        %v2374 = vsub.s32 0, %v2373
        %v2375 = vrot.slane %v2367, %v2374
        %v2378 = vcombine.low %v2371, %v2375
        %v2380 = vmul.f32 %v172, %v2378
        %2381 = vst [vmem:[%s171] sm:$0xff] %v2380
        %s2382 = sand.u32 %s75, 1
        %s2383 = scalar_lea.sflag [#allocation4], %s2382
        %s2384 = sand.u32 %s75, 1
        %s2385 = smul.addr %s2384, 8
        %s2386 = scalar_lea.vmem [#allocation7], %s2385
        // Predicated region
        $region37: #{tpu_custom_call.1} parent=27 // pred_check
          %p2387 = pneg %p85
        $region38: #{tpu_custom_call.1} parent=27 // pred_check_branch
          %2389 = sbr.rel (%p2387) target = $region40
        $region39: #{tpu_custom_call.1} parent=27 // pred_region
          %s2391 = ssub.s32 128, 128
          %2392 = vsyncadd %s2383, %s2391
          %s2393 = smul.addr %s20, 2
          %s2394 = smul.addr %s2393, 64
          %s2395 = scalar_lea.hbm %s2, %s2394
          %s2397 = sshll.u32 %s2386, 4
          %s2398 = int_to_ptr.vmem [resolvable:$true] %s2397
          %2400 = dma.vmem_to_hbm [thread:$0]  %s2398, 128, %s2395, %s2383
        $region40: #{tpu_custom_call.1} parent=27 // pred_fallthru
          _
      $region28: #{tpu_custom_call.1} parent=5 // pred_fallthru
        _
      %p2401 = scmp.le.s32.totalorder 2, %s15
      // Predicated region
      $region41: #{tpu_custom_call.1} parent=5 // pred_check
        %p2402 = pneg %p2401
      $region42: #{tpu_custom_call.1} parent=5 // pred_check_branch
        %2404 = sbr.rel (%p2402) target = $region44
      $region43: #{tpu_custom_call.1} parent=5 // pred_region
        %s2405 = ssub.s32 %s15, 2
        // Predicated region
        $region45: #{tpu_custom_call.1} parent=43 // pred_check
          %p2406 = pneg %p91
        $region46: #{tpu_custom_call.1} parent=43 // pred_check_branch
          %2408 = sbr.rel (%p2406) target = $region48
        $region47: #{tpu_custom_call.1} parent=43 // pred_region
          %s2409 = sand.u32 %s76, 1
          %s2410 = scalar_lea.sflag [#allocation4], %s2409
          %s2411 = sand.u32 %s76, 1
          %s2412 = smul.addr %s2411, 8
          %s2413 = scalar_lea.vmem [#allocation7], %s2412
          %2414 = dma.done %s2410, 128
        $region48: #{tpu_custom_call.1} parent=43 // pred_fallthru
          _
      $region44: #{tpu_custom_call.1} parent=5 // pred_fallthru
        _
    $region6: #{tpu_custom_call.1} parent=1 // loop_footer
      %s19 = sadd.s32 1, %s15
    $region7: #{tpu_custom_call.1} parent=1 // loop_footer_branch
      %14 = sbr.rel target = $region3
    $region8: #{tpu_custom_call.1} parent=1 // loop_exit
      _
    %2415 = vsyncpa [#allocation3], 1
    %s2416 = scalar_lea.sflag [#allocation3], 1
    %2417 = vsyncpa %s2416, 1
    %2418 = vsyncpa [#allocation4], 1
    %s2419 = scalar_lea.sflag [#allocation4], 1
    %2420 = vsyncpa %s2419, 1
    %2421 = vsyncpa [#allocation5], 1
    %s2422 = scalar_lea.sflag [#allocation5], 1
    %2423 = vsyncpa %s2422, 1

</llo_original>
